<compile_context>
chip_gen: v7x
topology: tpu7x:2x2x1
jax: 0.10.0
libtpu: 0.0.40
codegen_flags: <defaults>
</compile_context>

<pallas_src>
import functools
import math

import jax
import jax.numpy as jnp
from jax import lax
from jax.experimental import pallas as pl
from jax.experimental.pallas import tpu as pltpu

VMEM = pl.BlockSpec(memory_space=pltpu.MemorySpace.VMEM)


# ----------------------------------------------------------------------------
# Kernel 1: fused modal encoders + causal-variable extractor.
#   refs layout: [x_m]*M, [w1,b1,gamma,beta,w2,b2]*M, ew, eb, out
#   out: (B, M*N*D) — per-modality flat causal vars concatenated along lanes.
# ----------------------------------------------------------------------------
def _front_kernel(*refs, num_modalities):
    M = num_modalities
    x_refs = refs[:M]
    enc_refs = refs[M:M + 6 * M]
    ew_ref, eb_ref = refs[M + 6 * M], refs[M + 6 * M + 1]
    o_ref = refs[M + 6 * M + 2]

    ew = ew_ref[...]
    eb = eb_ref[...]
    for m in range(M):
        x = x_refs[m][...]
        w1, b1, gamma, beta, w2, b2 = (r[...] for r in enc_refs[6 * m:6 * m + 6])
        h = jnp.dot(x, w1, preferred_element_type=jnp.float32) + b1
        mu = jnp.mean(h, axis=-1, keepdims=True)
        var = jnp.mean((h - mu) ** 2, axis=-1, keepdims=True)
        hn = (h - mu) * lax.rsqrt(var + 1e-5) * gamma + beta
        hn = jnp.maximum(hn, 0.0)
        enc = jnp.dot(hn, w2, preferred_element_type=jnp.float32) + b2        # (B, D)
        cv = jnp.dot(enc, ew, preferred_element_type=jnp.float32) + eb        # (B, N*D)
        w = cv.shape[1]
        o_ref[:, m * w:(m + 1) * w] = cv                                      # lane-aligned


# ----------------------------------------------------------------------------
# Kernel 2: alignment + structure learner + mechanisms + intervention loop.
# ----------------------------------------------------------------------------
def _back_kernel(x_ref,
                 sw1a_ref, sw1b_ref, sb1_ref, sw2_ref, sb2_ref, padj_ref,
                 mw1a_ref, mw1b_ref, mb1_ref, mw2_ref, mb2_ref,
                 pw1a_ref, pw1b_ref, pb1_ref, pw2_ref, pb2_ref,
                 o_aligned_ref, o_adj_ref, o_mech_ref, o_interv_ref,
                 *, batch, num_vars, causal_dim, num_modalities,
                 prior_weight, max_steps):
    f32 = jnp.float32
    B, N, D, M = batch, num_vars, causal_dim, num_modalities
    R = B * N

    # ---- 1) cross-modal alignment: per-row MxM softmax attention + mean ----
    # x_ref is (R, M*D); each modality slab is a lane-dense (R, D) slice.
    xs = [x_ref[:, m * D:(m + 1) * D] for m in range(M)]
    inv_sqrt_d = 1.0 / math.sqrt(D)
    acc = jnp.zeros((R, D), f32)
    for m in range(M):
        s = [jnp.sum(xs[m] * xs[n], axis=-1, keepdims=True) * inv_sqrt_d
             for n in range(M)]
        mmax = s[0]
        for n in range(1, M):
            mmax = jnp.maximum(mmax, s[n])
        e = [jnp.exp(sn - mmax) for sn in s]
        denom = e[0]
        for n in range(1, M):
            denom = denom + e[n]
        inv = pl.reciprocal(denom, approx=True)            # EUP slot, ~free
        row = jnp.zeros((R, D), f32)
        for n in range(M):
            row = row + (e[n] * inv) * xs[n]
        acc = acc + row
    aligned = acc * (1.0 / M)                              # (R, D), row = b*N + n
    o_aligned_ref[...] = aligned

    # ---- 2) structure learner: score_net over all (b, i, j) pairs ----------
    # Linear over concat([vi, vj]) distributed as vi@W1a + vj@W1b — no pair
    # tensor in HBM, no concat in-kernel.
    u = jnp.dot(aligned, sw1a_ref[...], preferred_element_type=f32)    # (R, D)
    v = jnp.dot(aligned, sw1b_ref[...], preferred_element_type=f32)    # (R, D)
    h = jnp.maximum(u.reshape(B, N, 1, D) + v.reshape(B, 1, N, D) + sb1_ref[...],
                    0.0)                                               # (B, N, N, D)
    # out-dim-1 second layer as VPU multiply + lane reduction (lane-dense).
    logits = jnp.sum(h * sw2_ref[...], axis=-1) + sb2_ref[0, 0]        # (B, N, N)
    learned_adj = jnp.mean(jax.nn.sigmoid(logits), axis=0)             # (N, N)
    final_adj = (1.0 - prior_weight) * learned_adj + prior_weight * padj_ref[...]
    o_adj_ref[...] = final_adj

    # ---- block-diagonal adjacency  A = kron(I_B, final_adj)  (R, R) --------
    # so `adj @ vars` for every batch is ONE MXU matmul on 32 rows instead of
    # B separate 8-row pushes.  Built purely from iota masks + tiny matmuls.
    P = (lax.broadcasted_iota(jnp.int32, (R, N), 0) % N ==
         lax.broadcasted_iota(jnp.int32, (R, N), 1)).astype(f32)       # (R, N)
    S = (lax.broadcasted_iota(jnp.int32, (N, R), 1) % N ==
         lax.broadcasted_iota(jnp.int32, (N, R), 0)).astype(f32)       # (N, R)
    adj_tiled = jnp.dot(P, jnp.dot(final_adj, S, preferred_element_type=f32),
                        preferred_element_type=f32)                    # adj[i%N, j%N]
    same_blk = (lax.broadcasted_iota(jnp.int32, (R, R), 0) // N ==
                lax.broadcasted_iota(jnp.int32, (R, R), 1) // N)
    A = jnp.where(same_blk, adj_tiled, 0.0)                            # (R, R)

    def prop(state, w1a, w1b, b1, w2, b2):
        # eff = adj @ state (per batch), then MLP(concat(state, eff)) with the
        # concat distributed over split first-layer weights.
        eff = jnp.dot(A, state, preferred_element_type=f32)            # (R, D)
        hh = jnp.maximum(jnp.dot(state, w1a, preferred_element_type=f32)
                         + jnp.dot(eff, w1b, preferred_element_type=f32) + b1,
                         0.0)
        return jnp.dot(hh, w2, preferred_element_type=f32) + b2

    # ---- 3) mechanism predictor (one message-passing MLP step) -------------
    o_mech_ref[...] = prop(aligned, mw1a_ref[...], mw1b_ref[...], mb1_ref[...],
                           mw2_ref[...], mb2_ref[...])

    # ---- 4) intervention do(X_0 = 0) + max_steps propagation, all in VMEM --
    row_in_grp = lax.broadcasted_iota(jnp.int32, (R, D), 0) % N
    state = jnp.where(row_in_grp == 0, 0.0, aligned)
    pw1a, pw1b, pb1 = pw1a_ref[...], pw1b_ref[...], pb1_ref[...]
    pw2, pb2 = pw2_ref[...], pb2_ref[...]
    for _ in range(max_steps):
        state = prop(state, pw1a, pw1b, pb1, pw2, pb2)
    o_interv_ref[...] = state


# ----------------------------------------------------------------------------
# Parameter construction (deterministic, PyTorch-default-style uniform init)
# ----------------------------------------------------------------------------
def init_linear(key, fan_in, fan_out):
    kw, kb = jax.random.split(key)
    bound = 1.0 / math.sqrt(fan_in)
    w = jax.random.uniform(kw, (fan_in, fan_out), jnp.float32, -bound, bound)
    b = jax.random.uniform(kb, (1, fan_out), jnp.float32, -bound, bound)
    return w, b


def build_params(key, modality_dims, causal_dim, num_vars):
    D = causal_dim
    N = num_vars
    params = {}
    keys = jax.random.split(key, 16)

    # modal encoders: Linear(in, 2D) -> LayerNorm(2D) -> ReLU -> Linear(2D, D)
    params["encoders"] = {}
    for idx, (m, in_dim) in enumerate(modality_dims.items()):
        k1, k2 = jax.random.split(keys[idx])
        w1, b1 = init_linear(k1, in_dim, 2 * D)
        gamma = jnp.ones((1, 2 * D), jnp.float32)
        beta = jnp.zeros((1, 2 * D), jnp.float32)
        w2, b2 = init_linear(k2, 2 * D, D)
        params["encoders"][m] = (w1, b1, gamma, beta, w2, b2)

    # TODO(synk): CausalVariableExtractor is not defined in the reference; synthesized
    # here as a deterministic Linear(D, N*D) + reshape.
    params["extractor"] = init_linear(keys[8], D, N * D)

    # EnhancedStructureLearner score_net: Linear(2D, D) -> ReLU -> Linear(D, 1) -> Sigmoid
    sw1, sb1 = init_linear(keys[9], 2 * D, D)
    sw2, sb2 = init_linear(keys[10], D, 1)
    params["score_net"] = (sw1, sb1, sw2, sb2)

    # TODO(synk): CausalGraphDefinition is not defined in the reference; prior graph
    # synthesized as a deterministic chain DAG  i -> i+1.
    prior_adj = jnp.zeros((N, N), jnp.float32)
    prior_adj = prior_adj.at[jnp.arange(N - 1), jnp.arange(1, N)].set(1.0)
    params["prior_adj"] = prior_adj

    # InterventionEffectCalculator propagation_net: Linear(2D, D) -> ReLU -> Linear(D, D)
    pw1, pb1 = init_linear(keys[11], 2 * D, D)
    pw2, pb2 = init_linear(keys[12], D, D)
    params["propagation"] = (pw1, pb1, pw2, pb2)

    # TODO(synk): ClearMechanismPredictor is not defined in the reference; synthesized
    # as one adj-message-passing MLP step with its own weights.
    mw1, mb1 = init_linear(keys[13], 2 * D, D)
    mw2, mb2 = init_linear(keys[14], D, D)
    params["mechanism"] = (mw1, mb1, mw2, mb2)
    return params


# ----------------------------------------------------------------------------
# CausalEnhancedDiscovery forward (retrieval_mode=False path)
# ----------------------------------------------------------------------------
def causal_enhanced_discovery_forward(
    modal_features, params, *, prior_weight, num_vars, causal_dim, max_steps=3
):
    D, N = causal_dim, num_vars
    names = list(modal_features.keys())
    M = len(names)
    B = modal_features[names[0]].shape[0]
    R = B * N

    # ---- Kernel 1: fused modal encoders + causal-variable extractor --------
    ew, eb = params["extractor"]
    front_in = [modal_features[m] for m in names]
    for m in names:
        front_in.extend(params["encoders"][m])
    front_in.extend([ew, eb])
    cv_cat = pl.pallas_call(
        functools.partial(_front_kernel, num_modalities=M),
        out_shape=jax.ShapeDtypeStruct((B, M * N * D), jnp.float32),
        in_specs=[VMEM] * len(front_in),
        out_specs=VMEM,
    )(*front_in)

    # Same raw memory layout as torch.stack(..., dim=1).contiguous().view(B*N, M, D).
    # Contiguous reshape is free in XLA; last dim M*D keeps each modality slab
    # lane-dense inside the back kernel.
    x_view = cv_cat.reshape(R, M * D)

    sw1, sb1, sw2, sb2 = params["score_net"]
    mw1, mb1, mw2, mb2 = params["mechanism"]
    pw1, pb1, pw2, pb2 = params["propagation"]
    back_in = [
        x_view,
        sw1[:D], sw1[D:], sb1, jnp.transpose(sw2), sb2,
        params["prior_adj"],
        mw1[:D], mw1[D:], mb1, mw2, mb2,
        pw1[:D], pw1[D:], pb1, pw2, pb2,
    ]
    aligned_flat, final_adj, mech_flat, interv_flat = pl.pallas_call(
        functools.partial(
            _back_kernel, batch=B, num_vars=N, causal_dim=D, num_modalities=M,
            prior_weight=float(prior_weight), max_steps=max_steps),
        out_shape=(
            jax.ShapeDtypeStruct((R, D), jnp.float32),
            jax.ShapeDtypeStruct((N, N), jnp.float32),
            jax.ShapeDtypeStruct((R, D), jnp.float32),
            jax.ShapeDtypeStruct((R, D), jnp.float32),
        ),
        in_specs=[VMEM] * len(back_in),
        out_specs=(VMEM, VMEM, VMEM, VMEM),
    )(*back_in)

    # TODO(synk): retrieval_mode=True branch (nn.MultiheadAttention) not implemented;
    # default forward path only.
    return {
        "causal_vars": aligned_flat.reshape(B, N, D),
        "adj_matrix": final_adj,
        "mechanisms": mech_flat.reshape(B, N, D),
        "intervention_effects": interv_flat.reshape(B, N, D),
    }


# ----------------------------------------------------------------------------
if __name__ == "__main__":
    B = 4
    causal_dim = 128
    num_vars = 8
    prior_weight = 0.3
    modality_dims = {"vision": 64, "text": 96}

    key = jax.random.PRNGKey(0)
    k_vis, k_txt, k_params = jax.random.split(key, 3)
    modal_features = {
        "vision": jax.random.normal(k_vis, (B, modality_dims["vision"]), jnp.float32),
        "text": jax.random.normal(k_txt, (B, modality_dims["text"]), jnp.float32),
    }
    params = build_params(k_params, modality_dims, causal_dim, num_vars)

    out = causal_enhanced_discovery_forward(
        modal_features,
        params,
        prior_weight=prior_weight,
        num_vars=num_vars,
        causal_dim=causal_dim,
        max_steps=3,
    )
    for leaf in jax.tree_util.tree_leaves(out):
        leaf.block_until_ready()

    assert out["causal_vars"].shape == (B, num_vars, causal_dim)
    assert out["adj_matrix"].shape == (num_vars, num_vars)
    assert out["mechanisms"].shape == (B, num_vars, causal_dim)
    assert out["intervention_effects"].shape == (B, num_vars, causal_dim)
    for name, leaf in out.items():
        assert bool(jnp.all(jnp.isfinite(leaf))), name
    print("KERNEL_OK")
</pallas_src>

<mosaic_0001>
module attributes {stable_mosaic.version = 11 : i64} {
  func.func @_front_kernel(%arg0: memref<4x64xf32, #tpu.memory_space<vmem>>, %arg1: memref<4x96xf32, #tpu.memory_space<vmem>>, %arg2: memref<64x256xf32, #tpu.memory_space<vmem>>, %arg3: memref<1x256xf32, #tpu.memory_space<vmem>>, %arg4: memref<1x256xf32, #tpu.memory_space<vmem>>, %arg5: memref<1x256xf32, #tpu.memory_space<vmem>>, %arg6: memref<256x128xf32, #tpu.memory_space<vmem>>, %arg7: memref<1x128xf32, #tpu.memory_space<vmem>>, %arg8: memref<96x256xf32, #tpu.memory_space<vmem>>, %arg9: memref<1x256xf32, #tpu.memory_space<vmem>>, %arg10: memref<1x256xf32, #tpu.memory_space<vmem>>, %arg11: memref<1x256xf32, #tpu.memory_space<vmem>>, %arg12: memref<256x128xf32, #tpu.memory_space<vmem>>, %arg13: memref<1x128xf32, #tpu.memory_space<vmem>>, %arg14: memref<128x1024xf32, #tpu.memory_space<vmem>>, %arg15: memref<1x1024xf32, #tpu.memory_space<vmem>>, %arg16: memref<4x2048xf32, #tpu.memory_space<vmem>>) attributes {dimension_semantics = [], scalar_prefetch = 0 : i64, scratch_operands = 0 : i64, tpu.core_type = #tpu.core_type<tc>} {
    %c0 = arith.constant 0 : index
    %c0_0 = arith.constant 0 : index
    %0 = vector.load %arg14[%c0, %c0_0] : memref<128x1024xf32, #tpu.memory_space<vmem>>, vector<128x1024xf32>
    %c0_1 = arith.constant 0 : index
    %c0_2 = arith.constant 0 : index
    %1 = vector.load %arg15[%c0_1, %c0_2] : memref<1x1024xf32, #tpu.memory_space<vmem>>, vector<1x1024xf32>
    %c0_3 = arith.constant 0 : index
    %c0_4 = arith.constant 0 : index
    %2 = vector.load %arg0[%c0_3, %c0_4] : memref<4x64xf32, #tpu.memory_space<vmem>>, vector<4x64xf32>
    %c0_5 = arith.constant 0 : index
    %c0_6 = arith.constant 0 : index
    %3 = vector.load %arg2[%c0_5, %c0_6] : memref<64x256xf32, #tpu.memory_space<vmem>>, vector<64x256xf32>
    %c0_7 = arith.constant 0 : index
    %c0_8 = arith.constant 0 : index
    %4 = vector.load %arg3[%c0_7, %c0_8] : memref<1x256xf32, #tpu.memory_space<vmem>>, vector<1x256xf32>
    %c0_9 = arith.constant 0 : index
    %c0_10 = arith.constant 0 : index
    %5 = vector.load %arg4[%c0_9, %c0_10] : memref<1x256xf32, #tpu.memory_space<vmem>>, vector<1x256xf32>
    %c0_11 = arith.constant 0 : index
    %c0_12 = arith.constant 0 : index
    %6 = vector.load %arg5[%c0_11, %c0_12] : memref<1x256xf32, #tpu.memory_space<vmem>>, vector<1x256xf32>
    %c0_13 = arith.constant 0 : index
    %c0_14 = arith.constant 0 : index
    %7 = vector.load %arg6[%c0_13, %c0_14] : memref<256x128xf32, #tpu.memory_space<vmem>>, vector<256x128xf32>
    %c0_15 = arith.constant 0 : index
    %c0_16 = arith.constant 0 : index
    %8 = vector.load %arg7[%c0_15, %c0_16] : memref<1x128xf32, #tpu.memory_space<vmem>>, vector<1x128xf32>
    %cst = arith.constant dense<0.000000e+00> : vector<4x256xf32>
    %9 = tpu.matmul %2, %3, %cst {dimension_numbers = #tpu.dot_dimension_numbers<[1], [0], [0], [1], [0, 0, 1, 1], [], []>} : vector<4x64xf32>, vector<64x256xf32>, vector<4x256xf32> -> vector<4x256xf32>
    %10 = vector.broadcast %4 : vector<1x256xf32> to vector<4x256xf32>
    %11 = arith.addf %9, %10 : vector<4x256xf32>
    %cst_17 = arith.constant dense<0.000000e+00> : vector<4xf32>
    %12 = vector.multi_reduction <add>, %11, %cst_17 [1] : vector<4x256xf32> to vector<4xf32>
    %13 = vector.shape_cast %12 : vector<4xf32> to vector<4x1xf32>
    %cst_18 = arith.constant 2.560000e+02 : f32
    %14 = vector.broadcast %cst_18 : f32 to vector<4x1xf32>
    %15 = arith.divf %13, %14 : vector<4x1xf32>
    %16 = vector.broadcast %15 : vector<4x1xf32> to vector<4x256xf32>
    %17 = arith.subf %11, %16 : vector<4x256xf32>
    %18 = arith.mulf %17, %17 : vector<4x256xf32>
    %cst_19 = arith.constant dense<0.000000e+00> : vector<4xf32>
    %19 = vector.multi_reduction <add>, %18, %cst_19 [1] : vector<4x256xf32> to vector<4xf32>
    %20 = vector.shape_cast %19 : vector<4xf32> to vector<4x1xf32>
    %cst_20 = arith.constant 2.560000e+02 : f32
    %21 = vector.broadcast %cst_20 : f32 to vector<4x1xf32>
    %22 = arith.divf %20, %21 : vector<4x1xf32>
    %23 = vector.broadcast %15 : vector<4x1xf32> to vector<4x256xf32>
    %24 = arith.subf %11, %23 : vector<4x256xf32>
    %cst_21 = arith.constant 9.99999974E-6 : f32
    %25 = vector.broadcast %cst_21 : f32 to vector<4x1xf32>
    %26 = arith.addf %22, %25 : vector<4x1xf32>
    %27 = math.rsqrt %26 : vector<4x1xf32>
    %28 = vector.broadcast %27 : vector<4x1xf32> to vector<4x256xf32>
    %29 = arith.mulf %24, %28 : vector<4x256xf32>
    %30 = vector.broadcast %5 : vector<1x256xf32> to vector<4x256xf32>
    %31 = arith.mulf %29, %30 : vector<4x256xf32>
    %32 = vector.broadcast %6 : vector<1x256xf32> to vector<4x256xf32>
    %33 = arith.addf %31, %32 : vector<4x256xf32>
    %cst_22 = arith.constant 0.000000e+00 : f32
    %34 = vector.broadcast %cst_22 : f32 to vector<4x256xf32>
    %35 = arith.maximumf %33, %34 : vector<4x256xf32>
    %cst_23 = arith.constant dense<0.000000e+00> : vector<4x128xf32>
    %36 = tpu.matmul %35, %7, %cst_23 {dimension_numbers = #tpu.dot_dimension_numbers<[1], [0], [0], [1], [0, 0, 1, 1], [], []>} : vector<4x256xf32>, vector<256x128xf32>, vector<4x128xf32> -> vector<4x128xf32>
    %37 = vector.broadcast %8 : vector<1x128xf32> to vector<4x128xf32>
    %38 = arith.addf %36, %37 : vector<4x128xf32>
    %cst_24 = arith.constant dense<0.000000e+00> : vector<4x1024xf32>
    %39 = tpu.matmul %38, %0, %cst_24 {dimension_numbers = #tpu.dot_dimension_numbers<[1], [0], [0], [1], [0, 0, 1, 1], [], []>} : vector<4x128xf32>, vector<128x1024xf32>, vector<4x1024xf32> -> vector<4x1024xf32>
    %40 = vector.broadcast %1 : vector<1x1024xf32> to vector<4x1024xf32>
    %41 = arith.addf %39, %40 : vector<4x1024xf32>
    %c0_25 = arith.constant 0 : index
    %c0_26 = arith.constant 0 : index
    %42 = vector.load %arg16[%c0_25, %c0_26] : memref<4x2048xf32, #tpu.memory_space<vmem>>, vector<4x1024xf32>
    tpu.vector_store %arg16[%c0_25, %c0_26], %41 {strides = array<i32>} : memref<4x2048xf32, #tpu.memory_space<vmem>>, vector<4x1024xf32>,
    %c0_27 = arith.constant 0 : index
    %c0_28 = arith.constant 0 : index
    %43 = vector.load %arg1[%c0_27, %c0_28] : memref<4x96xf32, #tpu.memory_space<vmem>>, vector<4x96xf32>
    %c0_29 = arith.constant 0 : index
    %c0_30 = arith.constant 0 : index
    %44 = vector.load %arg8[%c0_29, %c0_30] : memref<96x256xf32, #tpu.memory_space<vmem>>, vector<96x256xf32>
    %c0_31 = arith.constant 0 : index
    %c0_32 = arith.constant 0 : index
    %45 = vector.load %arg9[%c0_31, %c0_32] : memref<1x256xf32, #tpu.memory_space<vmem>>, vector<1x256xf32>
    %c0_33 = arith.constant 0 : index
    %c0_34 = arith.constant 0 : index
    %46 = vector.load %arg10[%c0_33, %c0_34] : memref<1x256xf32, #tpu.memory_space<vmem>>, vector<1x256xf32>
    %c0_35 = arith.constant 0 : index
    %c0_36 = arith.constant 0 : index
    %47 = vector.load %arg11[%c0_35, %c0_36] : memref<1x256xf32, #tpu.memory_space<vmem>>, vector<1x256xf32>
    %c0_37 = arith.constant 0 : index
    %c0_38 = arith.constant 0 : index
    %48 = vector.load %arg12[%c0_37, %c0_38] : memref<256x128xf32, #tpu.memory_space<vmem>>, vector<256x128xf32>
    %c0_39 = arith.constant 0 : index
    %c0_40 = arith.constant 0 : index
    %49 = vector.load %arg13[%c0_39, %c0_40] : memref<1x128xf32, #tpu.memory_space<vmem>>, vector<1x128xf32>
    %cst_41 = arith.constant dense<0.000000e+00> : vector<4x256xf32>
    %50 = tpu.matmul %43, %44, %cst_41 {dimension_numbers = #tpu.dot_dimension_numbers<[1], [0], [0], [1], [0, 0, 1, 1], [], []>} : vector<4x96xf32>, vector<96x256xf32>, vector<4x256xf32> -> vector<4x256xf32>
    %51 = vector.broadcast %45 : vector<1x256xf32> to vector<4x256xf32>
    %52 = arith.addf %50, %51 : vector<4x256xf32>
    %cst_42 = arith.constant dense<0.000000e+00> : vector<4xf32>
    %53 = vector.multi_reduction <add>, %52, %cst_42 [1] : vector<4x256xf32> to vector<4xf32>
    %54 = vector.shape_cast %53 : vector<4xf32> to vector<4x1xf32>
    %cst_43 = arith.constant 2.560000e+02 : f32
    %55 = vector.broadcast %cst_43 : f32 to vector<4x1xf32>
    %56 = arith.divf %54, %55 : vector<4x1xf32>
    %57 = vector.broadcast %56 : vector<4x1xf32> to vector<4x256xf32>
    %58 = arith.subf %52, %57 : vector<4x256xf32>
    %59 = arith.mulf %58, %58 : vector<4x256xf32>
    %cst_44 = arith.constant dense<0.000000e+00> : vector<4xf32>
    %60 = vector.multi_reduction <add>, %59, %cst_44 [1] : vector<4x256xf32> to vector<4xf32>
    %61 = vector.shape_cast %60 : vector<4xf32> to vector<4x1xf32>
    %cst_45 = arith.constant 2.560000e+02 : f32
    %62 = vector.broadcast %cst_45 : f32 to vector<4x1xf32>
    %63 = arith.divf %61, %62 : vector<4x1xf32>
    %64 = vector.broadcast %56 : vector<4x1xf32> to vector<4x256xf32>
    %65 = arith.subf %52, %64 : vector<4x256xf32>
    %cst_46 = arith.constant 9.99999974E-6 : f32
    %66 = vector.broadcast %cst_46 : f32 to vector<4x1xf32>
    %67 = arith.addf %63, %66 : vector<4x1xf32>
    %68 = math.rsqrt %67 : vector<4x1xf32>
    %69 = vector.broadcast %68 : vector<4x1xf32> to vector<4x256xf32>
    %70 = arith.mulf %65, %69 : vector<4x256xf32>
    %71 = vector.broadcast %46 : vector<1x256xf32> to vector<4x256xf32>
    %72 = arith.mulf %70, %71 : vector<4x256xf32>
    %73 = vector.broadcast %47 : vector<1x256xf32> to vector<4x256xf32>
    %74 = arith.addf %72, %73 : vector<4x256xf32>
    %cst_47 = arith.constant 0.000000e+00 : f32
    %75 = vector.broadcast %cst_47 : f32 to vector<4x256xf32>
    %76 = arith.maximumf %74, %75 : vector<4x256xf32>
    %cst_48 = arith.constant dense<0.000000e+00> : vector<4x128xf32>
    %77 = tpu.matmul %76, %48, %cst_48 {dimension_numbers = #tpu.dot_dimension_numbers<[1], [0], [0], [1], [0, 0, 1, 1], [], []>} : vector<4x256xf32>, vector<256x128xf32>, vector<4x128xf32> -> vector<4x128xf32>
    %78 = vector.broadcast %49 : vector<1x128xf32> to vector<4x128xf32>
    %79 = arith.addf %77, %78 : vector<4x128xf32>
    %cst_49 = arith.constant dense<0.000000e+00> : vector<4x1024xf32>
    %80 = tpu.matmul %79, %0, %cst_49 {dimension_numbers = #tpu.dot_dimension_numbers<[1], [0], [0], [1], [0, 0, 1, 1], [], []>} : vector<4x128xf32>, vector<128x1024xf32>, vector<4x1024xf32> -> vector<4x1024xf32>
    %81 = vector.broadcast %1 : vector<1x1024xf32> to vector<4x1024xf32>
    %82 = arith.addf %80, %81 : vector<4x1024xf32>
    %c0_50 = arith.constant 0 : index
    %c1024 = arith.constant 1024 : index
    %83 = vector.load %arg16[%c0_50, %c1024] : memref<4x2048xf32, #tpu.memory_space<vmem>>, vector<4x1024xf32>
    tpu.vector_store %arg16[%c0_50, %c1024], %82 {strides = array<i32>} : memref<4x2048xf32, #tpu.memory_space<vmem>>, vector<4x1024xf32>,
    return
  }
}

</mosaic_0001>

<llo_original>
// kernel: tpu_custom_call.1
$region0: #{tpu_custom_call.1}
  #allocation0 [shape = 'u32[]', space=smem, size = 0x4, offset = 0x4, fixed_abs, tag = 'smem constant byte address 0x4 - core index']
  #allocation1 [shape = 'u32[144,128]{1,0:T(1,128)}', space=vmem, size = 0x12000, scoped, tag = 'internal scratch']
  %s0 = inlined_call_operand.hbm [shape: f32[4,64], index: 0, kind: input, shape index: {}]
  %s1 = inlined_call_operand.hbm [shape: f32[4,96], index: 1, kind: input, shape index: {}]
  %s2 = inlined_call_operand.hbm [shape: f32[64,256], index: 2, kind: input, shape index: {}]
  %s3 = inlined_call_operand.vmem [shape: f32[1,256], index: 3, kind: input, shape index: {}]
  %s4 = inlined_call_operand.vmem [shape: f32[1,256], index: 4, kind: input, shape index: {}]
  %s5 = inlined_call_operand.vmem [shape: f32[1,256], index: 5, kind: input, shape index: {}]
  %s6 = inlined_call_operand.hbm [shape: f32[256,128], index: 6, kind: input, shape index: {}]
  %s7 = inlined_call_operand.vmem [shape: f32[1,128], index: 7, kind: input, shape index: {}]
  %s8 = inlined_call_operand.hbm [shape: f32[96,256], index: 8, kind: input, shape index: {}]
  %s9 = inlined_call_operand.vmem [shape: f32[1,256], index: 9, kind: input, shape index: {}]
  %s10 = inlined_call_operand.vmem [shape: f32[1,256], index: 10, kind: input, shape index: {}]
  %s11 = inlined_call_operand.vmem [shape: f32[1,256], index: 11, kind: input, shape index: {}]
  %s12 = inlined_call_operand.hbm [shape: f32[256,128], index: 12, kind: input, shape index: {}]
  %s13 = inlined_call_operand.vmem [shape: f32[1,128], index: 13, kind: input, shape index: {}]
  %s14 = inlined_call_operand.hbm [shape: f32[128,1024], index: 14, kind: input, shape index: {}]
  %s15 = inlined_call_operand.vmem [shape: f32[1,1024], index: 15, kind: input, shape index: {}]
  %s16 = inlined_call_operand.hbm [shape: f32[4,2048], index: 16, kind: output, shape index: {}]
  %s17 = sld [smem:[#allocation0]]
  $region102: #{tpu_custom_call.1} parent=0
    _
  %s19 = ssub.s32 1, %s17
  %s20 = scalar_select 0, %s19, %s17
  $region1: #{tpu_custom_call.1} parent=0
    #allocation2 [shape = 'u8[2048]{0}', space=vmem, size = 0x800, scoped, tag = 'input window, operand 0, single buffered']
    #allocation3 [shape = 's32[1]{0}', space=sflag, size = 0x4, scoped, tag = 'scoped memory for tpu_custom_call.1']
    #allocation4 [shape = 's32[1]{0}', space=sflag, size = 0x4, scoped, tag = 'scoped memory for tpu_custom_call.1']
    #allocation5 [shape = 'u8[2048]{0}', space=vmem, size = 0x800, scoped, tag = 'input window, operand 1, single buffered']
    #allocation6 [shape = 's32[1]{0}', space=sflag, size = 0x4, scoped, tag = 'scoped memory for tpu_custom_call.1']
    #allocation7 [shape = 'u8[65536]{0}', space=vmem, size = 0x10000, scoped, tag = 'input window, operand 2, single buffered']
    #allocation8 [shape = 'u8[131072]{0}', space=vmem, size = 0x20000, scoped, tag = 'input window, operand 6, single buffered']
    #allocation9 [shape = 's32[1]{0}', space=sflag, size = 0x4, scoped, tag = 'scoped memory for tpu_custom_call.1']
    #allocation10 [shape = 'u8[98304]{0}', space=vmem, size = 0x18000, scoped, tag = 'input window, operand 8, single buffered']
    #allocation11 [shape = 'u8[131072]{0}', space=vmem, size = 0x20000, scoped, tag = 'input window, operand 12, single buffered']
    #allocation12 [shape = 's32[1]{0}', space=sflag, size = 0x4, scoped, tag = 'scoped memory for tpu_custom_call.1']
    #allocation13 [shape = 'u8[524288]{0}', space=vmem, size = 0x80000, scoped, tag = 'input window, operand 14, single buffered']
    #allocation14 [shape = 'u8[32768]{0}', space=vmem, size = 0x8000, scoped, tag = 'output window, operand 0, single buffered']
    %21 = vsyncpa [#allocation3], 0
    %22 = vsyncpa [#allocation6], 0
    %23 = vsyncpa [#allocation9], 0
    %24 = vsyncpa [#allocation12], 0
    %25 = vsyncpa [#allocation4], 0
    // Predicated region
    $region2: #{tpu_custom_call.1} parent=1 // pred_check
      _
    $region3: #{tpu_custom_call.1} parent=1 // pred_check_branch
      %27 = sbr.rel (0) target = $region5
    $region4: #{tpu_custom_call.1} parent=1 // pred_region
      %s29 = ssub.s32 64, 64
      %30 = vsyncadd [#allocation3], %s29
      %s32 = sshll.u32 [#allocation2], 4
      %s33 = int_to_ptr.vmem [resolvable:$true] %s32
      %35 = dma.hbm_to_vmem [thread:$0]  %s0, 64, %s33, [#allocation3]
    $region5: #{tpu_custom_call.1} parent=1 // pred_fallthru
      _
    // Predicated region
    $region6: #{tpu_custom_call.1} parent=1 // pred_check
      _
    $region7: #{tpu_custom_call.1} parent=1 // pred_check_branch
      %37 = sbr.rel (0) target = $region9
    $region8: #{tpu_custom_call.1} parent=1 // pred_region
      %s39 = ssub.s32 64, 64
      %40 = vsyncadd [#allocation6], %s39
      %s42 = sshll.u32 [#allocation5], 4
      %s43 = int_to_ptr.vmem [resolvable:$true] %s42
      %45 = dma.hbm_to_vmem [thread:$0]  %s1, 64, %s43, [#allocation6]
    $region9: #{tpu_custom_call.1} parent=1 // pred_fallthru
      _
    // Predicated region
    $region10: #{tpu_custom_call.1} parent=1 // pred_check
      _
    $region11: #{tpu_custom_call.1} parent=1 // pred_check_branch
      %47 = sbr.rel (0) target = $region13
    $region12: #{tpu_custom_call.1} parent=1 // pred_region
      %s49 = ssub.s32 2048, 2048
      %50 = vsyncadd [#allocation6], %s49
      %s51 = sshll.u32 [#allocation7], 4
      %s52 = int_to_ptr.vmem [resolvable:$true] %s51
      %57 = dma.hbm_to_vmem [thread:$0]  %s2, 2048, %s52, [#allocation6], 256, 256, 16
    $region13: #{tpu_custom_call.1} parent=1 // pred_fallthru
      _
    // Predicated region
    $region14: #{tpu_custom_call.1} parent=1 // pred_check
      _
    $region15: #{tpu_custom_call.1} parent=1 // pred_check_branch
      %59 = sbr.rel (0) target = $region17
    $region16: #{tpu_custom_call.1} parent=1 // pred_region
      _
    $region17: #{tpu_custom_call.1} parent=1 // pred_fallthru
      _
    // Predicated region
    $region18: #{tpu_custom_call.1} parent=1 // pred_check
      _
    $region19: #{tpu_custom_call.1} parent=1 // pred_check_branch
      %61 = sbr.rel (0) target = $region21
    $region20: #{tpu_custom_call.1} parent=1 // pred_region
      _
    $region21: #{tpu_custom_call.1} parent=1 // pred_fallthru
      _
    // Predicated region
    $region22: #{tpu_custom_call.1} parent=1 // pred_check
      _
    $region23: #{tpu_custom_call.1} parent=1 // pred_check_branch
      %63 = sbr.rel (0) target = $region25
    $region24: #{tpu_custom_call.1} parent=1 // pred_region
      _
    $region25: #{tpu_custom_call.1} parent=1 // pred_fallthru
      _
    // Predicated region
    $region26: #{tpu_custom_call.1} parent=1 // pred_check
      _
    $region27: #{tpu_custom_call.1} parent=1 // pred_check_branch
      %65 = sbr.rel (0) target = $region29
    $region28: #{tpu_custom_call.1} parent=1 // pred_region
      %s67 = ssub.s32 4096, 4096
      %68 = vsyncadd [#allocation9], %s67
      %s69 = sshll.u32 [#allocation8], 4
      %s70 = int_to_ptr.vmem [resolvable:$true] %s69
      %75 = dma.hbm_to_vmem [thread:$0]  %s6, 4096, %s70, [#allocation9], 128, 128, 8
    $region29: #{tpu_custom_call.1} parent=1 // pred_fallthru
      _
    // Predicated region
    $region30: #{tpu_custom_call.1} parent=1 // pred_check
      _
    $region31: #{tpu_custom_call.1} parent=1 // pred_check_branch
      %77 = sbr.rel (0) target = $region33
    $region32: #{tpu_custom_call.1} parent=1 // pred_region
      _
    $region33: #{tpu_custom_call.1} parent=1 // pred_fallthru
      _
    // Predicated region
    $region34: #{tpu_custom_call.1} parent=1 // pred_check
      _
    $region35: #{tpu_custom_call.1} parent=1 // pred_check_branch
      %79 = sbr.rel (0) target = $region37
    $region36: #{tpu_custom_call.1} parent=1 // pred_region
      %s81 = ssub.s32 3072, 3072
      %82 = vsyncadd [#allocation9], %s81
      %s83 = sshll.u32 [#allocation10], 4
      %s84 = int_to_ptr.vmem [resolvable:$true] %s83
      %89 = dma.hbm_to_vmem [thread:$0]  %s8, 3072, %s84, [#allocation9], 256, 256, 16
    $region37: #{tpu_custom_call.1} parent=1 // pred_fallthru
      _
    // Predicated region
    $region38: #{tpu_custom_call.1} parent=1 // pred_check
      _
    $region39: #{tpu_custom_call.1} parent=1 // pred_check_branch
      %91 = sbr.rel (0) target = $region41
    $region40: #{tpu_custom_call.1} parent=1 // pred_region
      _
    $region41: #{tpu_custom_call.1} parent=1 // pred_fallthru
      _
    // Predicated region
    $region42: #{tpu_custom_call.1} parent=1 // pred_check
      _
    $region43: #{tpu_custom_call.1} parent=1 // pred_check_branch
      %93 = sbr.rel (0) target = $region45
    $region44: #{tpu_custom_call.1} parent=1 // pred_region
      _
    $region45: #{tpu_custom_call.1} parent=1 // pred_fallthru
      _
    // Predicated region
    $region46: #{tpu_custom_call.1} parent=1 // pred_check
      _
    $region47: #{tpu_custom_call.1} parent=1 // pred_check_branch
      %95 = sbr.rel (0) target = $region49
    $region48: #{tpu_custom_call.1} parent=1 // pred_region
      _
    $region49: #{tpu_custom_call.1} parent=1 // pred_fallthru
      _
    // Predicated region
    $region50: #{tpu_custom_call.1} parent=1 // pred_check
      _
    $region51: #{tpu_custom_call.1} parent=1 // pred_check_branch
      %97 = sbr.rel (0) target = $region53
    $region52: #{tpu_custom_call.1} parent=1 // pred_region
      %s99 = ssub.s32 4096, 4096
      %100 = vsyncadd [#allocation12], %s99
      %s101 = sshll.u32 [#allocation11], 4
      %s102 = int_to_ptr.vmem [resolvable:$true] %s101
      %107 = dma.hbm_to_vmem [thread:$0]  %s12, 4096, %s102, [#allocation12], 128, 128, 8
    $region53: #{tpu_custom_call.1} parent=1 // pred_fallthru
      _
    // Predicated region
    $region54: #{tpu_custom_call.1} parent=1 // pred_check
      _
    $region55: #{tpu_custom_call.1} parent=1 // pred_check_branch
      %109 = sbr.rel (0) target = $region57
    $region56: #{tpu_custom_call.1} parent=1 // pred_region
      _
    $region57: #{tpu_custom_call.1} parent=1 // pred_fallthru
      _
    // Predicated region
    $region58: #{tpu_custom_call.1} parent=1 // pred_check
      _
    $region59: #{tpu_custom_call.1} parent=1 // pred_check_branch
      %111 = sbr.rel (0) target = $region61
    $region60: #{tpu_custom_call.1} parent=1 // pred_region
      %s113 = ssub.s32 16384, 16384
      %114 = vsyncadd [#allocation12], %s113
      %s115 = sshll.u32 [#allocation13], 4
      %s116 = int_to_ptr.vmem [resolvable:$true] %s115
      %121 = dma.hbm_to_vmem [thread:$0]  %s14, 16384, %s116, [#allocation12], 1024, 1024, 64
    $region61: #{tpu_custom_call.1} parent=1 // pred_fallthru
      _
    // Predicated region
    $region62: #{tpu_custom_call.1} parent=1 // pred_check
      _
    $region63: #{tpu_custom_call.1} parent=1 // pred_check_branch
      %123 = sbr.rel (0) target = $region65
    $region64: #{tpu_custom_call.1} parent=1 // pred_region
      _
    $region65: #{tpu_custom_call.1} parent=1 // pred_fallthru
      _
    // Predicated region
    $region66: #{tpu_custom_call.1} parent=1 // pred_check
      _
    $region67: #{tpu_custom_call.1} parent=1 // pred_check_branch
      %125 = sbr.rel (0) target = $region69
    $region68: #{tpu_custom_call.1} parent=1 // pred_region
      %126 = dma.done [#allocation3], 64
    $region69: #{tpu_custom_call.1} parent=1 // pred_fallthru
      _
    // Predicated region
    $region70: #{tpu_custom_call.1} parent=1 // pred_check
      _
    $region71: #{tpu_custom_call.1} parent=1 // pred_check_branch
      %128 = sbr.rel (0) target = $region73
    $region72: #{tpu_custom_call.1} parent=1 // pred_region
      %129 = dma.done [#allocation6], 64
    $region73: #{tpu_custom_call.1} parent=1 // pred_fallthru
      _
    // Predicated region
    $region74: #{tpu_custom_call.1} parent=1 // pred_check
      _
    $region75: #{tpu_custom_call.1} parent=1 // pred_check_branch
      %131 = sbr.rel (0) target = $region77
    $region76: #{tpu_custom_call.1} parent=1 // pred_region
      %132 = dma.done [#allocation6], 2048
    $region77: #{tpu_custom_call.1} parent=1 // pred_fallthru
      _
    // Predicated region
    $region78: #{tpu_custom_call.1} parent=1 // pred_check
      _
    $region79: #{tpu_custom_call.1} parent=1 // pred_check_branch
      %134 = sbr.rel (0) target = $region81
    $region80: #{tpu_custom_call.1} parent=1 // pred_region
      %135 = dma.done [#allocation9], 4096
    $region81: #{tpu_custom_call.1} parent=1 // pred_fallthru
      _
    // Predicated region
    $region82: #{tpu_custom_call.1} parent=1 // pred_check
      _
    $region83: #{tpu_custom_call.1} parent=1 // pred_check_branch
      %137 = sbr.rel (0) target = $region85
    $region84: #{tpu_custom_call.1} parent=1 // pred_region
      %138 = dma.done [#allocation9], 3072
    $region85: #{tpu_custom_call.1} parent=1 // pred_fallthru
      _
    // Predicated region
    $region86: #{tpu_custom_call.1} parent=1 // pred_check
      _
    $region87: #{tpu_custom_call.1} parent=1 // pred_check_branch
      %140 = sbr.rel (0) target = $region89
    $region88: #{tpu_custom_call.1} parent=1 // pred_region
      %141 = dma.done [#allocation12], 4096
    $region89: #{tpu_custom_call.1} parent=1 // pred_fallthru
      _
    // Predicated region
    $region90: #{tpu_custom_call.1} parent=1 // pred_check
      _
    $region91: #{tpu_custom_call.1} parent=1 // pred_check_branch
      %143 = sbr.rel (0) target = $region93
    $region92: #{tpu_custom_call.1} parent=1 // pred_region
      %144 = dma.done [#allocation12], 16384
    $region93: #{tpu_custom_call.1} parent=1 // pred_fallthru
      _
    %v145 = vld [vmem:[#allocation13] sm:$0xff]
    %v146 = vld [vmem:[#allocation13 + $0x8] sm:$0xff]
    %v147 = vld [vmem:[#allocation13 + $0x10] sm:$0xff]
    %v148 = vld [vmem:[#allocation13 + $0x18] sm:$0xff]
    %v149 = vld [vmem:[#allocation13 + $0x20] sm:$0xff]
    %v150 = vld [vmem:[#allocation13 + $0x28] sm:$0xff]
    %v151 = vld [vmem:[#allocation13 + $0x30] sm:$0xff]
    %v152 = vld [vmem:[#allocation13 + $0x38] sm:$0xff]
    %v153 = vld [vmem:[#allocation13 + $0x40] sm:$0xff]
    %v154 = vld [vmem:[#allocation13 + $0x48] sm:$0xff]
    %v155 = vld [vmem:[#allocation13 + $0x50] sm:$0xff]
    %v156 = vld [vmem:[#allocation13 + $0x58] sm:$0xff]
    %v157 = vld [vmem:[#allocation13 + $0x60] sm:$0xff]
    %v158 = vld [vmem:[#allocation13 + $0x68] sm:$0xff]
    %v159 = vld [vmem:[#allocation13 + $0x70] sm:$0xff]
    %v160 = vld [vmem:[#allocation13 + $0x78] sm:$0xff]
    %v161 = vld [vmem:[#allocation13 + $0x80] sm:$0xff]
    %v162 = vld [vmem:[#allocation13 + $0x88] sm:$0xff]
    %v163 = vld [vmem:[#allocation13 + $0x90] sm:$0xff]
    %v164 = vld [vmem:[#allocation13 + $0x98] sm:$0xff]
    %v165 = vld [vmem:[#allocation13 + $0xa0] sm:$0xff]
    %v166 = vld [vmem:[#allocation13 + $0xa8] sm:$0xff]
    %v167 = vld [vmem:[#allocation13 + $0xb0] sm:$0xff]
    %v168 = vld [vmem:[#allocation13 + $0xb8] sm:$0xff]
    %v169 = vld [vmem:[#allocation13 + $0xc0] sm:$0xff]
    %v170 = vld [vmem:[#allocation13 + $0xc8] sm:$0xff]
    %v171 = vld [vmem:[#allocation13 + $0xd0] sm:$0xff]
    %v172 = vld [vmem:[#allocation13 + $0xd8] sm:$0xff]
    %v173 = vld [vmem:[#allocation13 + $0xe0] sm:$0xff]
    %v174 = vld [vmem:[#allocation13 + $0xe8] sm:$0xff]
    %v175 = vld [vmem:[#allocation13 + $0xf0] sm:$0xff]
    %v176 = vld [vmem:[#allocation13 + $0xf8] sm:$0xff]
    %v177 = vld [vmem:[#allocation13 + $0x100] sm:$0xff]
    %v178 = vld [vmem:[#allocation13 + $0x108] sm:$0xff]
    %v179 = vld [vmem:[#allocation13 + $0x110] sm:$0xff]
    %v180 = vld [vmem:[#allocation13 + $0x118] sm:$0xff]
    %v181 = vld [vmem:[#allocation13 + $0x120] sm:$0xff]
    %v182 = vld [vmem:[#allocation13 + $0x128] sm:$0xff]
    %v183 = vld [vmem:[#allocation13 + $0x130] sm:$0xff]
    %v184 = vld [vmem:[#allocation13 + $0x138] sm:$0xff]
    %v185 = vld [vmem:[#allocation13 + $0x140] sm:$0xff]
    %v186 = vld [vmem:[#allocation13 + $0x148] sm:$0xff]
    %v187 = vld [vmem:[#allocation13 + $0x150] sm:$0xff]
    %v188 = vld [vmem:[#allocation13 + $0x158] sm:$0xff]
    %v189 = vld [vmem:[#allocation13 + $0x160] sm:$0xff]
    %v190 = vld [vmem:[#allocation13 + $0x168] sm:$0xff]
    %v191 = vld [vmem:[#allocation13 + $0x170] sm:$0xff]
    %v192 = vld [vmem:[#allocation13 + $0x178] sm:$0xff]
    %v193 = vld [vmem:[#allocation13 + $0x180] sm:$0xff]
    %v194 = vld [vmem:[#allocation13 + $0x188] sm:$0xff]
    %v195 = vld [vmem:[#allocation13 + $0x190] sm:$0xff]
    %v196 = vld [vmem:[#allocation13 + $0x198] sm:$0xff]
    %v197 = vld [vmem:[#allocation13 + $0x1a0] sm:$0xff]
    %v198 = vld [vmem:[#allocation13 + $0x1a8] sm:$0xff]
    %v199 = vld [vmem:[#allocation13 + $0x1b0] sm:$0xff]
    %v200 = vld [vmem:[#allocation13 + $0x1b8] sm:$0xff]
    %v201 = vld [vmem:[#allocation13 + $0x1c0] sm:$0xff]
    %v202 = vld [vmem:[#allocation13 + $0x1c8] sm:$0xff]
    %v203 = vld [vmem:[#allocation13 + $0x1d0] sm:$0xff]
    %v204 = vld [vmem:[#allocation13 + $0x1d8] sm:$0xff]
    %v205 = vld [vmem:[#allocation13 + $0x1e0] sm:$0xff]
    %v206 = vld [vmem:[#allocation13 + $0x1e8] sm:$0xff]
    %v207 = vld [vmem:[#allocation13 + $0x1f0] sm:$0xff]
    %v208 = vld [vmem:[#allocation13 + $0x1f8] sm:$0xff]
    %v209 = vld [vmem:[#allocation13 + $0x200] sm:$0xff]
    %v210 = vld [vmem:[#allocation13 + $0x208] sm:$0xff]
    %v211 = vld [vmem:[#allocation13 + $0x210] sm:$0xff]
    %v212 = vld [vmem:[#allocation13 + $0x218] sm:$0xff]
    %v213 = vld [vmem:[#allocation13 + $0x220] sm:$0xff]
    %v214 = vld [vmem:[#allocation13 + $0x228] sm:$0xff]
    %v215 = vld [vmem:[#allocation13 + $0x230] sm:$0xff]
    %v216 = vld [vmem:[#allocation13 + $0x238] sm:$0xff]
    %v217 = vld [vmem:[#allocation13 + $0x240] sm:$0xff]
    %v218 = vld [vmem:[#allocation13 + $0x248] sm:$0xff]
    %v219 = vld [vmem:[#allocation13 + $0x250] sm:$0xff]
    %v220 = vld [vmem:[#allocation13 + $0x258] sm:$0xff]
    %v221 = vld [vmem:[#allocation13 + $0x260] sm:$0xff]
    %v222 = vld [vmem:[#allocation13 + $0x268] sm:$0xff]
    %v223 = vld [vmem:[#allocation13 + $0x270] sm:$0xff]
    %v224 = vld [vmem:[#allocation13 + $0x278] sm:$0xff]
    %v225 = vld [vmem:[#allocation13 + $0x280] sm:$0xff]
    %v226 = vld [vmem:[#allocation13 + $0x288] sm:$0xff]
    %v227 = vld [vmem:[#allocation13 + $0x290] sm:$0xff]
    %v228 = vld [vmem:[#allocation13 + $0x298] sm:$0xff]
    %v229 = vld [vmem:[#allocation13 + $0x2a0] sm:$0xff]
    %v230 = vld [vmem:[#allocation13 + $0x2a8] sm:$0xff]
    %v231 = vld [vmem:[#allocation13 + $0x2b0] sm:$0xff]
    %v232 = vld [vmem:[#allocation13 + $0x2b8] sm:$0xff]
    %v233 = vld [vmem:[#allocation13 + $0x2c0] sm:$0xff]
    %v234 = vld [vmem:[#allocation13 + $0x2c8] sm:$0xff]
    %v235 = vld [vmem:[#allocation13 + $0x2d0] sm:$0xff]
    %v236 = vld [vmem:[#allocation13 + $0x2d8] sm:$0xff]
    %v237 = vld [vmem:[#allocation13 + $0x2e0] sm:$0xff]
    %v238 = vld [vmem:[#allocation13 + $0x2e8] sm:$0xff]
    %v239 = vld [vmem:[#allocation13 + $0x2f0] sm:$0xff]
    %v240 = vld [vmem:[#allocation13 + $0x2f8] sm:$0xff]
    %v241 = vld [vmem:[#allocation13 + $0x300] sm:$0xff]
    %v242 = vld [vmem:[#allocation13 + $0x308] sm:$0xff]
    %v243 = vld [vmem:[#allocation13 + $0x310] sm:$0xff]
    %v244 = vld [vmem:[#allocation13 + $0x318] sm:$0xff]
    %v245 = vld [vmem:[#allocation13 + $0x320] sm:$0xff]
    %v246 = vld [vmem:[#allocation13 + $0x328] sm:$0xff]
    %v247 = vld [vmem:[#allocation13 + $0x330] sm:$0xff]
    %v248 = vld [vmem:[#allocation13 + $0x338] sm:$0xff]
    %v249 = vld [vmem:[#allocation13 + $0x340] sm:$0xff]
    %v250 = vld [vmem:[#allocation13 + $0x348] sm:$0xff]
    %v251 = vld [vmem:[#allocation13 + $0x350] sm:$0xff]
    %v252 = vld [vmem:[#allocation13 + $0x358] sm:$0xff]
    %v253 = vld [vmem:[#allocation13 + $0x360] sm:$0xff]
    %v254 = vld [vmem:[#allocation13 + $0x368] sm:$0xff]
    %v255 = vld [vmem:[#allocation13 + $0x370] sm:$0xff]
    %v256 = vld [vmem:[#allocation13 + $0x378] sm:$0xff]
    %v257 = vld [vmem:[#allocation13 + $0x380] sm:$0xff]
    %v258 = vld [vmem:[#allocation13 + $0x388] sm:$0xff]
    %v259 = vld [vmem:[#allocation13 + $0x390] sm:$0xff]
    %v260 = vld [vmem:[#allocation13 + $0x398] sm:$0xff]
    %v261 = vld [vmem:[#allocation13 + $0x3a0] sm:$0xff]
    %v262 = vld [vmem:[#allocation13 + $0x3a8] sm:$0xff]
    %v263 = vld [vmem:[#allocation13 + $0x3b0] sm:$0xff]
    %v264 = vld [vmem:[#allocation13 + $0x3b8] sm:$0xff]
    %v265 = vld [vmem:[#allocation13 + $0x3c0] sm:$0xff]
    %v266 = vld [vmem:[#allocation13 + $0x3c8] sm:$0xff]
    %v267 = vld [vmem:[#allocation13 + $0x3d0] sm:$0xff]
    %v268 = vld [vmem:[#allocation13 + $0x3d8] sm:$0xff]
    %v269 = vld [vmem:[#allocation13 + $0x3e0] sm:$0xff]
    %v270 = vld [vmem:[#allocation13 + $0x3e8] sm:$0xff]
    %v271 = vld [vmem:[#allocation13 + $0x3f0] sm:$0xff]
    %v272 = vld [vmem:[#allocation13 + $0x3f8] sm:$0xff]
    %v273 = vld [vmem:[%s15] sm:$0xff]
    %v274 = vld [vmem:[#allocation2] sm:$0xf]
    %v275 = vld [vmem:[#allocation7] sm:$0xff]
    %v276 = vld [vmem:[#allocation7 + $0x8] sm:$0xff]
    %v277 = vld [vmem:[#allocation7 + $0x10] sm:$0xff]
    %v278 = vld [vmem:[#allocation7 + $0x18] sm:$0xff]
    %v279 = vld [vmem:[#allocation7 + $0x20] sm:$0xff]
    %v280 = vld [vmem:[#allocation7 + $0x28] sm:$0xff]
    %v281 = vld [vmem:[#allocation7 + $0x30] sm:$0xff]
    %v282 = vld [vmem:[#allocation7 + $0x38] sm:$0xff]
    %v283 = vld [vmem:[#allocation7 + $0x40] sm:$0xff]
    %v284 = vld [vmem:[#allocation7 + $0x48] sm:$0xff]
    %v285 = vld [vmem:[#allocation7 + $0x50] sm:$0xff]
    %v286 = vld [vmem:[#allocation7 + $0x58] sm:$0xff]
    %v287 = vld [vmem:[#allocation7 + $0x60] sm:$0xff]
    %v288 = vld [vmem:[#allocation7 + $0x68] sm:$0xff]
    %v289 = vld [vmem:[#allocation7 + $0x70] sm:$0xff]
    %v290 = vld [vmem:[#allocation7 + $0x78] sm:$0xff]
    %v291 = vld [vmem:[%s3] sm:$0x3]
    %v292 = vld [vmem:[%s4] sm:$0x3]
    %v293 = vld [vmem:[%s5] sm:$0x3]
    %v294 = vld [vmem:[#allocation8] sm:$0xff]
    %v295 = vld [vmem:[#allocation8 + $0x8] sm:$0xff]
    %v296 = vld [vmem:[#allocation8 + $0x10] sm:$0xff]
    %v297 = vld [vmem:[#allocation8 + $0x18] sm:$0xff]
    %v298 = vld [vmem:[#allocation8 + $0x20] sm:$0xff]
    %v299 = vld [vmem:[#allocation8 + $0x28] sm:$0xff]
    %v300 = vld [vmem:[#allocation8 + $0x30] sm:$0xff]
    %v301 = vld [vmem:[#allocation8 + $0x38] sm:$0xff]
    %v302 = vld [vmem:[#allocation8 + $0x40] sm:$0xff]
    %v303 = vld [vmem:[#allocation8 + $0x48] sm:$0xff]
    %v304 = vld [vmem:[#allocation8 + $0x50] sm:$0xff]
    %v305 = vld [vmem:[#allocation8 + $0x58] sm:$0xff]
    %v306 = vld [vmem:[#allocation8 + $0x60] sm:$0xff]
    %v307 = vld [vmem:[#allocation8 + $0x68] sm:$0xff]
    %v308 = vld [vmem:[#allocation8 + $0x70] sm:$0xff]
    %v309 = vld [vmem:[#allocation8 + $0x78] sm:$0xff]
    %v310 = vld [vmem:[#allocation8 + $0x80] sm:$0xff]
    %v311 = vld [vmem:[#allocation8 + $0x88] sm:$0xff]
    %v312 = vld [vmem:[#allocation8 + $0x90] sm:$0xff]
    %v313 = vld [vmem:[#allocation8 + $0x98] sm:$0xff]
    %v314 = vld [vmem:[#allocation8 + $0xa0] sm:$0xff]
    %v315 = vld [vmem:[#allocation8 + $0xa8] sm:$0xff]
    %v316 = vld [vmem:[#allocation8 + $0xb0] sm:$0xff]
    %v317 = vld [vmem:[#allocation8 + $0xb8] sm:$0xff]
    %v318 = vld [vmem:[#allocation8 + $0xc0] sm:$0xff]
    %v319 = vld [vmem:[#allocation8 + $0xc8] sm:$0xff]
    %v320 = vld [vmem:[#allocation8 + $0xd0] sm:$0xff]
    %v321 = vld [vmem:[#allocation8 + $0xd8] sm:$0xff]
    %v322 = vld [vmem:[#allocation8 + $0xe0] sm:$0xff]
    %v323 = vld [vmem:[#allocation8 + $0xe8] sm:$0xff]
    %v324 = vld [vmem:[#allocation8 + $0xf0] sm:$0xff]
    %v325 = vld [vmem:[#allocation8 + $0xf8] sm:$0xff]
    %v326 = vld [vmem:[%s7] sm:$0x1]
    %v328 = vlaneseq
    %v329 = vshrl.u32 %v328, 7
    %v330 = vsub.s32 0, %v329
    %v331 = vrot.slane %v291, %v330
    %v332 = vlaneseq
    %v333 = vshrl.u32 %v332, 7
    %v334 = vsub.s32 1, %v333
    %v335 = vrot.slane %v291, %v334
    %vm338 = vcmask 523264
    %v340 = vsel %vm338, %v274, 0
    %342 = vmatprep.subr.mxu0 %v276
    %343 = vmatpush1.msra.mxu0 %v275
    %344 = vmatprep.subr.mxu0 %v278
    %345 = vmatpush1.msra.mxu0 %v277
    %346 = vmatprep.subr.mxu0 %v280
    %347 = vmatpush1.msra.mxu0 %v279
    %348 = vmatprep.subr.mxu0 %v282
    %349 = vmatpush1.msra.mxu0 %v281
    %350 = vmatprep.subr.mxu0 %v284
    %351 = vmatpush1.msra.mxu0 %v283
    %352 = vmatprep.subr.mxu0 %v286
    %353 = vmatpush1.msra.mxu0 %v285
    %354 = vmatprep.subr.mxu0 %v288
    %355 = vmatpush1.msra.mxu0 %v287
    %356 = vmatprep.subr.mxu0 %v290
    %357 = vmatpush1.msra.mxu0 %v289
    %358 = vmatprep.subr.mxu0 0.0
    %359 = vmatpush1.msra.mxu0 0.0
    %360 = vmatprep.subr.mxu0 0.0
    %361 = vmatpush1.msra.mxu0 0.0
    %362 = vmatprep.subr.mxu0 0.0
    %363 = vmatpush1.msra.mxu0 0.0
    %364 = vmatprep.subr.mxu0 0.0
    %365 = vmatpush1.msra.mxu0 0.0
    %366 = vmatprep.subr.mxu0 0.0
    %367 = vmatpush1.msra.mxu0 0.0
    %368 = vmatprep.subr.mxu0 0.0
    %369 = vmatpush1.msra.mxu0 0.0
    %370 = vmatprep.subr.mxu0 0.0
    %371 = vmatpush1.msra.mxu0 0.0
    %372 = vmatprep.subr.mxu0 0.0
    %373 = vmatpush1.msra.mxu0 0.0
    %374 = vmatprep.subr.mxu0 0.0
    %375 = vmatpush1.msra.mxu0 0.0
    %376 = vmatprep.subr.mxu0 0.0
    %377 = vmatpush1.msra.mxu0 0.0
    %378 = vmatprep.subr.mxu0 0.0
    %379 = vmatpush1.msra.mxu0 0.0
    %380 = vmatprep.subr.mxu0 0.0
    %381 = vmatpush1.msra.mxu0 0.0
    %382 = vmatprep.subr.mxu0 0.0
    %383 = vmatpush1.msra.mxu0 0.0
    %384 = vmatprep.subr.mxu0 0.0
    %385 = vmatpush1.msra.mxu0 0.0
    %386 = vmatprep.subr.mxu0 0.0
    %387 = vmatpush1.msra.mxu0 0.0
    %388 = vmatprep.subr.mxu0 0.0
    %389 = vmatpush1.msra.mxu0 0.0
    %390 = vmatprep.subr.mxu0 0.0
    %391 = vmatpush1.msra.mxu0 0.0
    %392 = vmatprep.subr.mxu0 0.0
    %393 = vmatpush1.msra.mxu0 0.0
    %394 = vmatprep.subr.mxu0 0.0
    %395 = vmatpush1.msra.mxu0 0.0
    %396 = vmatprep.subr.mxu0 0.0
    %397 = vmatpush1.msra.mxu0 0.0
    %398 = vmatprep.subr.mxu0 0.0
    %399 = vmatpush1.msra.mxu0 0.0
    %400 = vmatprep.subr.mxu0 0.0
    %401 = vmatpush1.msra.mxu0 0.0
    %402 = vmatprep.subr.mxu0 0.0
    %403 = vmatpush1.msra.mxu0 0.0
    %404 = vmatprep.subr.mxu0 0.0
    %405 = vmatpush1.msra.mxu0 0.0
    %406 = vmatprep.mubr.f32.mxu0 0.0
    %407 = vmatmul.mubr.f32.gmra.mrb[0].mxu0 %v340
    %v408 = vpop.f32.mrb[0].mxu0
    %v409 = vadd.f32 %v331, %v408
    %v410 = vpop.f32.mrb[0].mxu0
    %v411 = vadd.f32 %v335, %v410
    %412 = vdwg.mxu0
    %vm413 = vcmask 1043456
    %v414 = vsel %vm413, %v409, 0.0
    %v415 = vsel %vm413, %v411, 0.0
    %v416 = vadd.f32 %v414, %v415
    %417 = vadd.xlane.f32.xlu0 %v416
    %v418 = vpop.xlane.xlu0 %417
    %v419 = vrcp.pop 256.0
    %v420 = vmul.f32 %v418, %v419
    %v421 = vsub.f32 %v409, %v420
    %v422 = vsub.f32 %v411, %v420
    %v423 = vmul.f32 %v421, %v421
    %v424 = vmul.f32 %v422, %v422
    %v425 = vsel %vm413, %v423, 0.0
    %v426 = vsel %vm413, %v424, 0.0
    %v427 = vadd.f32 %v425, %v426
    %428 = vadd.xlane.f32.xlu0 %v427
    %v429 = vpop.xlane.xlu0 %428
    %v430 = vmul.f32 %v429, %v419
    %v431 = vadd.f32 %v430, 1e-05
    %v432 = vrsqrt.pop %v431
    %v433 = vmul.f32 %v421, %v432
    %v434 = vmul.f32 %v422, %v432
    %v436 = vlaneseq
    %v437 = vshrl.u32 %v436, 7
    %v438 = vsub.s32 0, %v437
    %v439 = vrot.slane %v292, %v438
    %v440 = vlaneseq
    %v441 = vshrl.u32 %v440, 7
    %v442 = vsub.s32 1, %v441
    %v443 = vrot.slane %v292, %v442
    %v446 = vmul.f32 %v433, %v439
    %v447 = vmul.f32 %v434, %v443
    %v449 = vlaneseq
    %v450 = vshrl.u32 %v449, 7
    %v451 = vsub.s32 0, %v450
    %v452 = vrot.slane %v293, %v451
    %v453 = vlaneseq
    %v454 = vshrl.u32 %v453, 7
    %v455 = vsub.s32 1, %v454
    %v456 = vrot.slane %v293, %v455
    %v459 = vadd.f32 %v446, %v452
    %v460 = vadd.f32 %v447, %v456
    %v461 = vmax.f32 %v459, 0.0
    %v462 = vmax.f32 %v460, 0.0
    %v464 = vlaneseq
    %v465 = vshrl.u32 %v464, 7
    %v466 = vsub.s32 0, %v465
    %v467 = vrot.slane %v326, %v466
    %469 = vmatprep.subr.mxu0 0.0
    %470 = vmatpush1.msra.mxu0 %v294
    %471 = vmatprep.subr.mxu0 0.0
    %472 = vmatpush1.msra.mxu0 %v295
    %473 = vmatprep.subr.mxu0 0.0
    %474 = vmatpush1.msra.mxu0 %v296
    %475 = vmatprep.subr.mxu0 0.0
    %476 = vmatpush1.msra.mxu0 %v297
    %477 = vmatprep.subr.mxu0 0.0
    %478 = vmatpush1.msra.mxu0 %v298
    %479 = vmatprep.subr.mxu0 0.0
    %480 = vmatpush1.msra.mxu0 %v299
    %481 = vmatprep.subr.mxu0 0.0
    %482 = vmatpush1.msra.mxu0 %v300
    %483 = vmatprep.subr.mxu0 0.0
    %484 = vmatpush1.msra.mxu0 %v301
    %485 = vmatprep.subr.mxu0 0.0
    %486 = vmatpush1.msra.mxu0 %v302
    %487 = vmatprep.subr.mxu0 0.0
    %488 = vmatpush1.msra.mxu0 %v303
    %489 = vmatprep.subr.mxu0 0.0
    %490 = vmatpush1.msra.mxu0 %v304
    %491 = vmatprep.subr.mxu0 0.0
    %492 = vmatpush1.msra.mxu0 %v305
    %493 = vmatprep.subr.mxu0 0.0
    %494 = vmatpush1.msra.mxu0 %v306
    %495 = vmatprep.subr.mxu0 0.0
    %496 = vmatpush1.msra.mxu0 %v307
    %497 = vmatprep.subr.mxu0 0.0
    %498 = vmatpush1.msra.mxu0 %v308
    %499 = vmatprep.subr.mxu0 0.0
    %500 = vmatpush1.msra.mxu0 %v309
    %501 = vmatprep.subr.mxu0 0.0
    %502 = vmatpush1.msra.mxu0 %v310
    %503 = vmatprep.subr.mxu0 0.0
    %504 = vmatpush1.msra.mxu0 %v311
    %505 = vmatprep.subr.mxu0 0.0
    %506 = vmatpush1.msra.mxu0 %v312
    %507 = vmatprep.subr.mxu0 0.0
    %508 = vmatpush1.msra.mxu0 %v313
    %509 = vmatprep.subr.mxu0 0.0
    %510 = vmatpush1.msra.mxu0 %v314
    %511 = vmatprep.subr.mxu0 0.0
    %512 = vmatpush1.msra.mxu0 %v315
    %513 = vmatprep.subr.mxu0 0.0
    %514 = vmatpush1.msra.mxu0 %v316
    %515 = vmatprep.subr.mxu0 0.0
    %516 = vmatpush1.msra.mxu0 %v317
    %517 = vmatprep.subr.mxu0 0.0
    %518 = vmatpush1.msra.mxu0 %v318
    %519 = vmatprep.subr.mxu0 0.0
    %520 = vmatpush1.msra.mxu0 %v319
    %521 = vmatprep.subr.mxu0 0.0
    %522 = vmatpush1.msra.mxu0 %v320
    %523 = vmatprep.subr.mxu0 0.0
    %524 = vmatpush1.msra.mxu0 %v321
    %525 = vmatprep.subr.mxu0 0.0
    %526 = vmatpush1.msra.mxu0 %v322
    %527 = vmatprep.subr.mxu0 0.0
    %528 = vmatpush1.msra.mxu0 %v323
    %529 = vmatprep.subr.mxu0 0.0
    %530 = vmatpush1.msra.mxu0 %v324
    %531 = vmatprep.subr.mxu0 0.0
    %532 = vmatpush1.msra.mxu0 %v325
    %533 = vmatprep.mubr.f32.mxu0 %v462
    %534 = vmatmul.mubr.f32.gmra.mrb[0].mxu0 %v461
    %v535 = vpop.f32.mrb[0].mxu0
    %v536 = vadd.f32 %v467, %v535
    %v537 = vpop.f32.mrb[0].mxu0
    %538 = vdwg.mxu0
    %v540 = vlaneseq
    %v541 = vshrl.u32 %v540, 7
    %v542 = vsub.s32 0, %v541
    %v543 = vrot.slane %v273, %v542
    %v544 = vlaneseq
    %v545 = vshrl.u32 %v544, 7
    %v546 = vsub.s32 1, %v545
    %v547 = vrot.slane %v273, %v546
    %v548 = vlaneseq
    %v549 = vshrl.u32 %v548, 7
    %v550 = vsub.s32 2, %v549
    %v551 = vrot.slane %v273, %v550
    %v552 = vlaneseq
    %v553 = vshrl.u32 %v552, 7
    %v554 = vsub.s32 3, %v553
    %v555 = vrot.slane %v273, %v554
    %v556 = vlaneseq
    %v557 = vshrl.u32 %v556, 7
    %v558 = vsub.s32 4, %v557
    %v559 = vrot.slane %v273, %v558
    %v560 = vlaneseq
    %v561 = vshrl.u32 %v560, 7
    %v562 = vsub.s32 5, %v561
    %v563 = vrot.slane %v273, %v562
    %v564 = vlaneseq
    %v565 = vshrl.u32 %v564, 7
    %v566 = vsub.s32 6, %v565
    %v567 = vrot.slane %v273, %v566
    %v568 = vlaneseq
    %v569 = vshrl.u32 %v568, 7
    %v570 = vsub.s32 7, %v569
    %v571 = vrot.slane %v273, %v570
    %580 = vmatprep.subr.mxu0 %v146
    %581 = vmatpush1.msra.mxu0 %v145
    %582 = vmatprep.subr.mxu0 %v154
    %583 = vmatpush1.msra.mxu0 %v153
    %584 = vmatprep.subr.mxu0 %v162
    %585 = vmatpush1.msra.mxu0 %v161
    %586 = vmatprep.subr.mxu0 %v170
    %587 = vmatpush1.msra.mxu0 %v169
    %588 = vmatprep.subr.mxu0 %v178
    %589 = vmatpush1.msra.mxu0 %v177
    %590 = vmatprep.subr.mxu0 %v186
    %591 = vmatpush1.msra.mxu0 %v185
    %592 = vmatprep.subr.mxu0 %v194
    %593 = vmatpush1.msra.mxu0 %v193
    %594 = vmatprep.subr.mxu0 %v202
    %595 = vmatpush1.msra.mxu0 %v201
    %596 = vmatprep.subr.mxu0 %v210
    %597 = vmatpush1.msra.mxu0 %v209
    %598 = vmatprep.subr.mxu0 %v218
    %599 = vmatpush1.msra.mxu0 %v217
    %600 = vmatprep.subr.mxu0 %v226
    %601 = vmatpush1.msra.mxu0 %v225
    %602 = vmatprep.subr.mxu0 %v234
    %603 = vmatpush1.msra.mxu0 %v233
    %604 = vmatprep.subr.mxu0 %v242
    %605 = vmatpush1.msra.mxu0 %v241
    %606 = vmatprep.subr.mxu0 %v250
    %607 = vmatpush1.msra.mxu0 %v249
    %608 = vmatprep.subr.mxu0 %v258
    %609 = vmatpush1.msra.mxu0 %v257
    %610 = vmatprep.subr.mxu0 %v266
    %611 = vmatpush1.msra.mxu0 %v265
    %612 = vmatprep.subr.mxu0 0.0
    %613 = vmatpush1.msra.mxu0 0.0
    %614 = vmatprep.subr.mxu0 0.0
    %615 = vmatpush1.msra.mxu0 0.0
    %616 = vmatprep.subr.mxu0 0.0
    %617 = vmatpush1.msra.mxu0 0.0
    %618 = vmatprep.subr.mxu0 0.0
    %619 = vmatpush1.msra.mxu0 0.0
    %620 = vmatprep.subr.mxu0 0.0
    %621 = vmatpush1.msra.mxu0 0.0
    %622 = vmatprep.subr.mxu0 0.0
    %623 = vmatpush1.msra.mxu0 0.0
    %624 = vmatprep.subr.mxu0 0.0
    %625 = vmatpush1.msra.mxu0 0.0
    %626 = vmatprep.subr.mxu0 0.0
    %627 = vmatpush1.msra.mxu0 0.0
    %628 = vmatprep.subr.mxu0 0.0
    %629 = vmatpush1.msra.mxu0 0.0
    %630 = vmatprep.subr.mxu0 0.0
    %631 = vmatpush1.msra.mxu0 0.0
    %632 = vmatprep.subr.mxu0 0.0
    %633 = vmatpush1.msra.mxu0 0.0
    %634 = vmatprep.subr.mxu0 0.0
    %635 = vmatpush1.msra.mxu0 0.0
    %636 = vmatprep.subr.mxu0 0.0
    %637 = vmatpush1.msra.mxu0 0.0
    %638 = vmatprep.subr.mxu0 0.0
    %639 = vmatpush1.msra.mxu0 0.0
    %640 = vmatprep.subr.mxu0 0.0
    %641 = vmatpush1.msra.mxu0 0.0
    %642 = vmatprep.subr.mxu0 0.0
    %643 = vmatpush1.msra.mxu0 0.0
    %644 = vmatprep.mubr.f32.mxu0 0.0
    %645 = vmatmul.mubr.f32.gmra.mrb[0].mxu0 %v536
    %v646 = vpop.f32.mrb[0].mxu0
    %v647 = vadd.f32 %v543, %v646
    %v648 = vpop.f32.mrb[0].mxu0
    %v649 = vadd.f32 %v547, %v648
    %650 = vdwg.mxu0
    %651 = vmatprep.subr.mxu0 %v148
    %652 = vmatpush1.msra.mxu0 %v147
    %653 = vmatprep.subr.mxu0 %v156
    %654 = vmatpush1.msra.mxu0 %v155
    %655 = vmatprep.subr.mxu0 %v164
    %656 = vmatpush1.msra.mxu0 %v163
    %657 = vmatprep.subr.mxu0 %v172
    %658 = vmatpush1.msra.mxu0 %v171
    %659 = vmatprep.subr.mxu0 %v180
    %660 = vmatpush1.msra.mxu0 %v179
    %661 = vmatprep.subr.mxu0 %v188
    %662 = vmatpush1.msra.mxu0 %v187
    %663 = vmatprep.subr.mxu0 %v196
    %664 = vmatpush1.msra.mxu0 %v195
    %665 = vmatprep.subr.mxu0 %v204
    %666 = vmatpush1.msra.mxu0 %v203
    %667 = vmatprep.subr.mxu0 %v212
    %668 = vmatpush1.msra.mxu0 %v211
    %669 = vmatprep.subr.mxu0 %v220
    %670 = vmatpush1.msra.mxu0 %v219
    %671 = vmatprep.subr.mxu0 %v228
    %672 = vmatpush1.msra.mxu0 %v227
    %673 = vmatprep.subr.mxu0 %v236
    %674 = vmatpush1.msra.mxu0 %v235
    %675 = vmatprep.subr.mxu0 %v244
    %676 = vmatpush1.msra.mxu0 %v243
    %677 = vmatprep.subr.mxu0 %v252
    %678 = vmatpush1.msra.mxu0 %v251
    %679 = vmatprep.subr.mxu0 %v260
    %680 = vmatpush1.msra.mxu0 %v259
    %681 = vmatprep.subr.mxu0 %v268
    %682 = vmatpush1.msra.mxu0 %v267
    %683 = vmatprep.subr.mxu0 0.0
    %684 = vmatpush1.msra.mxu0 0.0
    %685 = vmatprep.subr.mxu0 0.0
    %686 = vmatpush1.msra.mxu0 0.0
    %687 = vmatprep.subr.mxu0 0.0
    %688 = vmatpush1.msra.mxu0 0.0
    %689 = vmatprep.subr.mxu0 0.0
    %690 = vmatpush1.msra.mxu0 0.0
    %691 = vmatprep.subr.mxu0 0.0
    %692 = vmatpush1.msra.mxu0 0.0
    %693 = vmatprep.subr.mxu0 0.0
    %694 = vmatpush1.msra.mxu0 0.0
    %695 = vmatprep.subr.mxu0 0.0
    %696 = vmatpush1.msra.mxu0 0.0
    %697 = vmatprep.subr.mxu0 0.0
    %698 = vmatpush1.msra.mxu0 0.0
    %699 = vmatprep.subr.mxu0 0.0
    %700 = vmatpush1.msra.mxu0 0.0
    %701 = vmatprep.subr.mxu0 0.0
    %702 = vmatpush1.msra.mxu0 0.0
    %703 = vmatprep.subr.mxu0 0.0
    %704 = vmatpush1.msra.mxu0 0.0
    %705 = vmatprep.subr.mxu0 0.0
    %706 = vmatpush1.msra.mxu0 0.0
    %707 = vmatprep.subr.mxu0 0.0
    %708 = vmatpush1.msra.mxu0 0.0
    %709 = vmatprep.subr.mxu0 0.0
    %710 = vmatpush1.msra.mxu0 0.0
    %711 = vmatprep.subr.mxu0 0.0
    %712 = vmatpush1.msra.mxu0 0.0
    %713 = vmatprep.subr.mxu0 0.0
    %714 = vmatpush1.msra.mxu0 0.0
    %715 = vmatprep.mubr.f32.mxu0 0.0
    %716 = vmatmul.mubr.f32.gmra.mrb[0].mxu0 %v536
    %v717 = vpop.f32.mrb[0].mxu0
    %v718 = vadd.f32 %v551, %v717
    %v719 = vpop.f32.mrb[0].mxu0
    %v720 = vadd.f32 %v555, %v719
    %721 = vdwg.mxu0
    %722 = vmatprep.subr.mxu0 %v150
    %723 = vmatpush1.msra.mxu0 %v149
    %724 = vmatprep.subr.mxu0 %v158
    %725 = vmatpush1.msra.mxu0 %v157
    %726 = vmatprep.subr.mxu0 %v166
    %727 = vmatpush1.msra.mxu0 %v165
    %728 = vmatprep.subr.mxu0 %v174
    %729 = vmatpush1.msra.mxu0 %v173
    %730 = vmatprep.subr.mxu0 %v182
    %731 = vmatpush1.msra.mxu0 %v181
    %732 = vmatprep.subr.mxu0 %v190
    %733 = vmatpush1.msra.mxu0 %v189
    %734 = vmatprep.subr.mxu0 %v198
    %735 = vmatpush1.msra.mxu0 %v197
    %736 = vmatprep.subr.mxu0 %v206
    %737 = vmatpush1.msra.mxu0 %v205
    %738 = vmatprep.subr.mxu0 %v214
    %739 = vmatpush1.msra.mxu0 %v213
    %740 = vmatprep.subr.mxu0 %v222
    %741 = vmatpush1.msra.mxu0 %v221
    %742 = vmatprep.subr.mxu0 %v230
    %743 = vmatpush1.msra.mxu0 %v229
    %744 = vmatprep.subr.mxu0 %v238
    %745 = vmatpush1.msra.mxu0 %v237
    %746 = vmatprep.subr.mxu0 %v246
    %747 = vmatpush1.msra.mxu0 %v245
    %748 = vmatprep.subr.mxu0 %v254
    %749 = vmatpush1.msra.mxu0 %v253
    %750 = vmatprep.subr.mxu0 %v262
    %751 = vmatpush1.msra.mxu0 %v261
    %752 = vmatprep.subr.mxu0 %v270
    %753 = vmatpush1.msra.mxu0 %v269
    %754 = vmatprep.subr.mxu0 0.0
    %755 = vmatpush1.msra.mxu0 0.0
    %756 = vmatprep.subr.mxu0 0.0
    %757 = vmatpush1.msra.mxu0 0.0
    %758 = vmatprep.subr.mxu0 0.0
    %759 = vmatpush1.msra.mxu0 0.0
    %760 = vmatprep.subr.mxu0 0.0
    %761 = vmatpush1.msra.mxu0 0.0
    %762 = vmatprep.subr.mxu0 0.0
    %763 = vmatpush1.msra.mxu0 0.0
    %764 = vmatprep.subr.mxu0 0.0
    %765 = vmatpush1.msra.mxu0 0.0
    %766 = vmatprep.subr.mxu0 0.0
    %767 = vmatpush1.msra.mxu0 0.0
    %768 = vmatprep.subr.mxu0 0.0
    %769 = vmatpush1.msra.mxu0 0.0
    %770 = vmatprep.subr.mxu0 0.0
    %771 = vmatpush1.msra.mxu0 0.0
    %772 = vmatprep.subr.mxu0 0.0
    %773 = vmatpush1.msra.mxu0 0.0
    %774 = vmatprep.subr.mxu0 0.0
    %775 = vmatpush1.msra.mxu0 0.0
    %776 = vmatprep.subr.mxu0 0.0
    %777 = vmatpush1.msra.mxu0 0.0
    %778 = vmatprep.subr.mxu0 0.0
    %779 = vmatpush1.msra.mxu0 0.0
    %780 = vmatprep.subr.mxu0 0.0
    %781 = vmatpush1.msra.mxu0 0.0
    %782 = vmatprep.subr.mxu0 0.0
    %783 = vmatpush1.msra.mxu0 0.0
    %784 = vmatprep.subr.mxu0 0.0
    %785 = vmatpush1.msra.mxu0 0.0
    %786 = vmatprep.mubr.f32.mxu0 0.0
    %787 = vmatmul.mubr.f32.gmra.mrb[0].mxu0 %v536
    %v788 = vpop.f32.mrb[0].mxu0
    %v789 = vadd.f32 %v559, %v788
    %v790 = vpop.f32.mrb[0].mxu0
    %v791 = vadd.f32 %v563, %v790
    %792 = vdwg.mxu0
    %793 = vmatprep.subr.mxu0 %v152
    %794 = vmatpush1.msra.mxu0 %v151
    %795 = vmatprep.subr.mxu0 %v160
    %796 = vmatpush1.msra.mxu0 %v159
    %797 = vmatprep.subr.mxu0 %v168
    %798 = vmatpush1.msra.mxu0 %v167
    %799 = vmatprep.subr.mxu0 %v176
    %800 = vmatpush1.msra.mxu0 %v175
    %801 = vmatprep.subr.mxu0 %v184
    %802 = vmatpush1.msra.mxu0 %v183
    %803 = vmatprep.subr.mxu0 %v192
    %804 = vmatpush1.msra.mxu0 %v191
    %805 = vmatprep.subr.mxu0 %v200
    %806 = vmatpush1.msra.mxu0 %v199
    %807 = vmatprep.subr.mxu0 %v208
    %808 = vmatpush1.msra.mxu0 %v207
    %809 = vmatprep.subr.mxu0 %v216
    %810 = vmatpush1.msra.mxu0 %v215
    %811 = vmatprep.subr.mxu0 %v224
    %812 = vmatpush1.msra.mxu0 %v223
    %813 = vmatprep.subr.mxu0 %v232
    %814 = vmatpush1.msra.mxu0 %v231
    %815 = vmatprep.subr.mxu0 %v240
    %816 = vmatpush1.msra.mxu0 %v239
    %817 = vmatprep.subr.mxu0 %v248
    %818 = vmatpush1.msra.mxu0 %v247
    %819 = vmatprep.subr.mxu0 %v256
    %820 = vmatpush1.msra.mxu0 %v255
    %821 = vmatprep.subr.mxu0 %v264
    %822 = vmatpush1.msra.mxu0 %v263
    %823 = vmatprep.subr.mxu0 %v272
    %824 = vmatpush1.msra.mxu0 %v271
    %825 = vmatprep.subr.mxu0 0.0
    %826 = vmatpush1.msra.mxu0 0.0
    %827 = vmatprep.subr.mxu0 0.0
    %828 = vmatpush1.msra.mxu0 0.0
    %829 = vmatprep.subr.mxu0 0.0
    %830 = vmatpush1.msra.mxu0 0.0
    %831 = vmatprep.subr.mxu0 0.0
    %832 = vmatpush1.msra.mxu0 0.0
    %833 = vmatprep.subr.mxu0 0.0
    %834 = vmatpush1.msra.mxu0 0.0
    %835 = vmatprep.subr.mxu0 0.0
    %836 = vmatpush1.msra.mxu0 0.0
    %837 = vmatprep.subr.mxu0 0.0
    %838 = vmatpush1.msra.mxu0 0.0
    %839 = vmatprep.subr.mxu0 0.0
    %840 = vmatpush1.msra.mxu0 0.0
    %841 = vmatprep.subr.mxu0 0.0
    %842 = vmatpush1.msra.mxu0 0.0
    %843 = vmatprep.subr.mxu0 0.0
    %844 = vmatpush1.msra.mxu0 0.0
    %845 = vmatprep.subr.mxu0 0.0
    %846 = vmatpush1.msra.mxu0 0.0
    %847 = vmatprep.subr.mxu0 0.0
    %848 = vmatpush1.msra.mxu0 0.0
    %849 = vmatprep.subr.mxu0 0.0
    %850 = vmatpush1.msra.mxu0 0.0
    %851 = vmatprep.subr.mxu0 0.0
    %852 = vmatpush1.msra.mxu0 0.0
    %853 = vmatprep.subr.mxu0 0.0
    %854 = vmatpush1.msra.mxu0 0.0
    %855 = vmatprep.subr.mxu0 0.0
    %856 = vmatpush1.msra.mxu0 0.0
    %857 = vmatprep.mubr.f32.mxu0 0.0
    %858 = vmatmul.mubr.f32.gmra.mrb[0].mxu0 %v536
    %v859 = vpop.f32.mrb[0].mxu0
    %v860 = vadd.f32 %v567, %v859
    %v861 = vpop.f32.mrb[0].mxu0
    %v862 = vadd.f32 %v571, %v861
    %863 = vdwg.mxu0
    %v872 = vcombine.low %v647, %v649
    %v873 = vcombine.low %v718, %v720
    %v874 = vcombine.low %v789, %v791
    %v875 = vcombine.low %v860, %v862
    %880 = vst [vmem:[#allocation14] sm:$0xff] %v872
    %881 = vst [vmem:[#allocation14 + $0x8] sm:$0xff] %v873
    %882 = vst [vmem:[#allocation14 + $0x10] sm:$0xff] %v874
    %883 = vst [vmem:[#allocation14 + $0x18] sm:$0xff] %v875
    %v884 = vld [vmem:[#allocation5] sm:$0xf]
    %v885 = vld [vmem:[#allocation10] sm:$0xff]
    %v886 = vld [vmem:[#allocation10 + $0x8] sm:$0xff]
    %v887 = vld [vmem:[#allocation10 + $0x10] sm:$0xff]
    %v888 = vld [vmem:[#allocation10 + $0x18] sm:$0xff]
    %v889 = vld [vmem:[#allocation10 + $0x20] sm:$0xff]
    %v890 = vld [vmem:[#allocation10 + $0x28] sm:$0xff]
    %v891 = vld [vmem:[#allocation10 + $0x30] sm:$0xff]
    %v892 = vld [vmem:[#allocation10 + $0x38] sm:$0xff]
    %v893 = vld [vmem:[#allocation10 + $0x40] sm:$0xff]
    %v894 = vld [vmem:[#allocation10 + $0x48] sm:$0xff]
    %v895 = vld [vmem:[#allocation10 + $0x50] sm:$0xff]
    %v896 = vld [vmem:[#allocation10 + $0x58] sm:$0xff]
    %v897 = vld [vmem:[#allocation10 + $0x60] sm:$0xff]
    %v898 = vld [vmem:[#allocation10 + $0x68] sm:$0xff]
    %v899 = vld [vmem:[#allocation10 + $0x70] sm:$0xff]
    %v900 = vld [vmem:[#allocation10 + $0x78] sm:$0xff]
    %v901 = vld [vmem:[#allocation10 + $0x80] sm:$0xff]
    %v902 = vld [vmem:[#allocation10 + $0x88] sm:$0xff]
    %v903 = vld [vmem:[#allocation10 + $0x90] sm:$0xff]
    %v904 = vld [vmem:[#allocation10 + $0x98] sm:$0xff]
    %v905 = vld [vmem:[#allocation10 + $0xa0] sm:$0xff]
    %v906 = vld [vmem:[#allocation10 + $0xa8] sm:$0xff]
    %v907 = vld [vmem:[#allocation10 + $0xb0] sm:$0xff]
    %v908 = vld [vmem:[#allocation10 + $0xb8] sm:$0xff]
    %v909 = vld [vmem:[%s9] sm:$0x3]
    %v910 = vld [vmem:[%s10] sm:$0x3]
    %v911 = vld [vmem:[%s11] sm:$0x3]
    %v912 = vld [vmem:[#allocation11] sm:$0xff]
    %v913 = vld [vmem:[#allocation11 + $0x8] sm:$0xff]
    %v914 = vld [vmem:[#allocation11 + $0x10] sm:$0xff]
    %v915 = vld [vmem:[#allocation11 + $0x18] sm:$0xff]
    %v916 = vld [vmem:[#allocation11 + $0x20] sm:$0xff]
    %v917 = vld [vmem:[#allocation11 + $0x28] sm:$0xff]
    %v918 = vld [vmem:[#allocation11 + $0x30] sm:$0xff]
    %v919 = vld [vmem:[#allocation11 + $0x38] sm:$0xff]
    %v920 = vld [vmem:[#allocation11 + $0x40] sm:$0xff]
    %v921 = vld [vmem:[#allocation11 + $0x48] sm:$0xff]
    %v922 = vld [vmem:[#allocation11 + $0x50] sm:$0xff]
    %v923 = vld [vmem:[#allocation11 + $0x58] sm:$0xff]
    %v924 = vld [vmem:[#allocation11 + $0x60] sm:$0xff]
    %v925 = vld [vmem:[#allocation11 + $0x68] sm:$0xff]
    %v926 = vld [vmem:[#allocation11 + $0x70] sm:$0xff]
    %v927 = vld [vmem:[#allocation11 + $0x78] sm:$0xff]
    %v928 = vld [vmem:[#allocation11 + $0x80] sm:$0xff]
    %v929 = vld [vmem:[#allocation11 + $0x88] sm:$0xff]
    %v930 = vld [vmem:[#allocation11 + $0x90] sm:$0xff]
    %v931 = vld [vmem:[#allocation11 + $0x98] sm:$0xff]
    %v932 = vld [vmem:[#allocation11 + $0xa0] sm:$0xff]
    %v933 = vld [vmem:[#allocation11 + $0xa8] sm:$0xff]
    %v934 = vld [vmem:[#allocation11 + $0xb0] sm:$0xff]
    %v935 = vld [vmem:[#allocation11 + $0xb8] sm:$0xff]
    %v936 = vld [vmem:[#allocation11 + $0xc0] sm:$0xff]
    %v937 = vld [vmem:[#allocation11 + $0xc8] sm:$0xff]
    %v938 = vld [vmem:[#allocation11 + $0xd0] sm:$0xff]
    %v939 = vld [vmem:[#allocation11 + $0xd8] sm:$0xff]
    %v940 = vld [vmem:[#allocation11 + $0xe0] sm:$0xff]
    %v941 = vld [vmem:[#allocation11 + $0xe8] sm:$0xff]
    %v942 = vld [vmem:[#allocation11 + $0xf0] sm:$0xff]
    %v943 = vld [vmem:[#allocation11 + $0xf8] sm:$0xff]
    %v944 = vld [vmem:[%s13] sm:$0x1]
    %v946 = vlaneseq
    %v947 = vshrl.u32 %v946, 7
    %v948 = vsub.s32 0, %v947
    %v949 = vrot.slane %v909, %v948
    %v950 = vlaneseq
    %v951 = vshrl.u32 %v950, 7
    %v952 = vsub.s32 1, %v951
    %v953 = vrot.slane %v909, %v952
    %vm956 = vcmask 785408
    %v958 = vsel %vm956, %v884, 0
    %960 = vmatprep.subr.mxu0 %v886
    %961 = vmatpush1.msra.mxu0 %v885
    %962 = vmatprep.subr.mxu0 %v888
    %963 = vmatpush1.msra.mxu0 %v887
    %964 = vmatprep.subr.mxu0 %v890
    %965 = vmatpush1.msra.mxu0 %v889
    %966 = vmatprep.subr.mxu0 %v892
    %967 = vmatpush1.msra.mxu0 %v891
    %968 = vmatprep.subr.mxu0 %v894
    %969 = vmatpush1.msra.mxu0 %v893
    %970 = vmatprep.subr.mxu0 %v896
    %971 = vmatpush1.msra.mxu0 %v895
    %972 = vmatprep.subr.mxu0 %v898
    %973 = vmatpush1.msra.mxu0 %v897
    %974 = vmatprep.subr.mxu0 %v900
    %975 = vmatpush1.msra.mxu0 %v899
    %976 = vmatprep.subr.mxu0 %v902
    %977 = vmatpush1.msra.mxu0 %v901
    %978 = vmatprep.subr.mxu0 %v904
    %979 = vmatpush1.msra.mxu0 %v903
    %980 = vmatprep.subr.mxu0 %v906
    %981 = vmatpush1.msra.mxu0 %v905
    %982 = vmatprep.subr.mxu0 %v908
    %983 = vmatpush1.msra.mxu0 %v907
    %984 = vmatprep.subr.mxu0 0.0
    %985 = vmatpush1.msra.mxu0 0.0
    %986 = vmatprep.subr.mxu0 0.0
    %987 = vmatpush1.msra.mxu0 0.0
    %988 = vmatprep.subr.mxu0 0.0
    %989 = vmatpush1.msra.mxu0 0.0
    %990 = vmatprep.subr.mxu0 0.0
    %991 = vmatpush1.msra.mxu0 0.0
    %992 = vmatprep.subr.mxu0 0.0
    %993 = vmatpush1.msra.mxu0 0.0
    %994 = vmatprep.subr.mxu0 0.0
    %995 = vmatpush1.msra.mxu0 0.0
    %996 = vmatprep.subr.mxu0 0.0
    %997 = vmatpush1.msra.mxu0 0.0
    %998 = vmatprep.subr.mxu0 0.0
    %999 = vmatpush1.msra.mxu0 0.0
    %1000 = vmatprep.subr.mxu0 0.0
    %1001 = vmatpush1.msra.mxu0 0.0
    %1002 = vmatprep.subr.mxu0 0.0
    %1003 = vmatpush1.msra.mxu0 0.0
    %1004 = vmatprep.subr.mxu0 0.0
    %1005 = vmatpush1.msra.mxu0 0.0
    %1006 = vmatprep.subr.mxu0 0.0
    %1007 = vmatpush1.msra.mxu0 0.0
    %1008 = vmatprep.subr.mxu0 0.0
    %1009 = vmatpush1.msra.mxu0 0.0
    %1010 = vmatprep.subr.mxu0 0.0
    %1011 = vmatpush1.msra.mxu0 0.0
    %1012 = vmatprep.subr.mxu0 0.0
    %1013 = vmatpush1.msra.mxu0 0.0
    %1014 = vmatprep.subr.mxu0 0.0
    %1015 = vmatpush1.msra.mxu0 0.0
    %1016 = vmatprep.subr.mxu0 0.0
    %1017 = vmatpush1.msra.mxu0 0.0
    %1018 = vmatprep.subr.mxu0 0.0
    %1019 = vmatpush1.msra.mxu0 0.0
    %1020 = vmatprep.subr.mxu0 0.0
    %1021 = vmatpush1.msra.mxu0 0.0
    %1022 = vmatprep.subr.mxu0 0.0
    %1023 = vmatpush1.msra.mxu0 0.0
    %1024 = vmatprep.mubr.f32.mxu0 0.0
    %1025 = vmatmul.mubr.f32.gmra.mrb[0].mxu0 %v958
    %v1026 = vpop.f32.mrb[0].mxu0
    %v1027 = vadd.f32 %v949, %v1026
    %v1028 = vpop.f32.mrb[0].mxu0
    %v1029 = vadd.f32 %v953, %v1028
    %1030 = vdwg.mxu0
    %v1031 = vsel %vm413, %v1027, 0.0
    %v1032 = vsel %vm413, %v1029, 0.0
    %v1033 = vadd.f32 %v1031, %v1032
    %1034 = vadd.xlane.f32.xlu0 %v1033
    %v1035 = vpop.xlane.xlu0 %1034
    %v1036 = vmul.f32 %v1035, %v419
    %v1037 = vsub.f32 %v1027, %v1036
    %v1038 = vsub.f32 %v1029, %v1036
    %v1039 = vmul.f32 %v1037, %v1037
    %v1040 = vmul.f32 %v1038, %v1038
    %v1041 = vsel %vm413, %v1039, 0.0
    %v1042 = vsel %vm413, %v1040, 0.0
    %v1043 = vadd.f32 %v1041, %v1042
    %1044 = vadd.xlane.f32.xlu0 %v1043
    %v1045 = vpop.xlane.xlu0 %1044
    %v1046 = vmul.f32 %v1045, %v419
    %v1047 = vadd.f32 %v1046, 1e-05
    %v1048 = vrsqrt.pop %v1047
    %v1049 = vmul.f32 %v1037, %v1048
    %v1050 = vmul.f32 %v1038, %v1048
    %v1052 = vlaneseq
    %v1053 = vshrl.u32 %v1052, 7
    %v1054 = vsub.s32 0, %v1053
    %v1055 = vrot.slane %v910, %v1054
    %v1056 = vlaneseq
    %v1057 = vshrl.u32 %v1056, 7
    %v1058 = vsub.s32 1, %v1057
    %v1059 = vrot.slane %v910, %v1058
    %v1062 = vmul.f32 %v1049, %v1055
    %v1063 = vmul.f32 %v1050, %v1059
    %v1065 = vlaneseq
    %v1066 = vshrl.u32 %v1065, 7
    %v1067 = vsub.s32 0, %v1066
    %v1068 = vrot.slane %v911, %v1067
    %v1069 = vlaneseq
    %v1070 = vshrl.u32 %v1069, 7
    %v1071 = vsub.s32 1, %v1070
    %v1072 = vrot.slane %v911, %v1071
    %v1075 = vadd.f32 %v1062, %v1068
    %v1076 = vadd.f32 %v1063, %v1072
    %v1077 = vmax.f32 %v1075, 0.0
    %v1078 = vmax.f32 %v1076, 0.0
    %v1080 = vlaneseq
    %v1081 = vshrl.u32 %v1080, 7
    %v1082 = vsub.s32 0, %v1081
    %v1083 = vrot.slane %v944, %v1082
    %1085 = vmatprep.subr.mxu0 0.0
    %1086 = vmatpush1.msra.mxu0 %v912
    %1087 = vmatprep.subr.mxu0 0.0
    %1088 = vmatpush1.msra.mxu0 %v913
    %1089 = vmatprep.subr.mxu0 0.0
    %1090 = vmatpush1.msra.mxu0 %v914
    %1091 = vmatprep.subr.mxu0 0.0
    %1092 = vmatpush1.msra.mxu0 %v915
    %1093 = vmatprep.subr.mxu0 0.0
    %1094 = vmatpush1.msra.mxu0 %v916
    %1095 = vmatprep.subr.mxu0 0.0
    %1096 = vmatpush1.msra.mxu0 %v917
    %1097 = vmatprep.subr.mxu0 0.0
    %1098 = vmatpush1.msra.mxu0 %v918
    %1099 = vmatprep.subr.mxu0 0.0
    %1100 = vmatpush1.msra.mxu0 %v919
    %1101 = vmatprep.subr.mxu0 0.0
    %1102 = vmatpush1.msra.mxu0 %v920
    %1103 = vmatprep.subr.mxu0 0.0
    %1104 = vmatpush1.msra.mxu0 %v921
    %1105 = vmatprep.subr.mxu0 0.0
    %1106 = vmatpush1.msra.mxu0 %v922
    %1107 = vmatprep.subr.mxu0 0.0
    %1108 = vmatpush1.msra.mxu0 %v923
    %1109 = vmatprep.subr.mxu0 0.0
    %1110 = vmatpush1.msra.mxu0 %v924
    %1111 = vmatprep.subr.mxu0 0.0
    %1112 = vmatpush1.msra.mxu0 %v925
    %1113 = vmatprep.subr.mxu0 0.0
    %1114 = vmatpush1.msra.mxu0 %v926
    %1115 = vmatprep.subr.mxu0 0.0
    %1116 = vmatpush1.msra.mxu0 %v927
    %1117 = vmatprep.subr.mxu0 0.0
    %1118 = vmatpush1.msra.mxu0 %v928
    %1119 = vmatprep.subr.mxu0 0.0
    %1120 = vmatpush1.msra.mxu0 %v929
    %1121 = vmatprep.subr.mxu0 0.0
    %1122 = vmatpush1.msra.mxu0 %v930
    %1123 = vmatprep.subr.mxu0 0.0
    %1124 = vmatpush1.msra.mxu0 %v931
    %1125 = vmatprep.subr.mxu0 0.0
    %1126 = vmatpush1.msra.mxu0 %v932
    %1127 = vmatprep.subr.mxu0 0.0
    %1128 = vmatpush1.msra.mxu0 %v933
    %1129 = vmatprep.subr.mxu0 0.0
    %1130 = vmatpush1.msra.mxu0 %v934
    %1131 = vmatprep.subr.mxu0 0.0
    %1132 = vmatpush1.msra.mxu0 %v935
    %1133 = vmatprep.subr.mxu0 0.0
    %1134 = vmatpush1.msra.mxu0 %v936
    %1135 = vmatprep.subr.mxu0 0.0
    %1136 = vmatpush1.msra.mxu0 %v937
    %1137 = vmatprep.subr.mxu0 0.0
    %1138 = vmatpush1.msra.mxu0 %v938
    %1139 = vmatprep.subr.mxu0 0.0
    %1140 = vmatpush1.msra.mxu0 %v939
    %1141 = vmatprep.subr.mxu0 0.0
    %1142 = vmatpush1.msra.mxu0 %v940
    %1143 = vmatprep.subr.mxu0 0.0
    %1144 = vmatpush1.msra.mxu0 %v941
    %1145 = vmatprep.subr.mxu0 0.0
    %1146 = vmatpush1.msra.mxu0 %v942
    %1147 = vmatprep.subr.mxu0 0.0
    %1148 = vmatpush1.msra.mxu0 %v943
    %1149 = vmatprep.mubr.f32.mxu0 %v1078
    %1150 = vmatmul.mubr.f32.gmra.mrb[0].mxu0 %v1077
    %v1151 = vpop.f32.mrb[0].mxu0
    %v1152 = vadd.f32 %v1083, %v1151
    %v1153 = vpop.f32.mrb[0].mxu0
    %1154 = vdwg.mxu0
    %1155 = vmatprep.subr.mxu0 %v146
    %1156 = vmatpush1.msra.mxu0 %v145
    %1157 = vmatprep.subr.mxu0 %v154
    %1158 = vmatpush1.msra.mxu0 %v153
    %1159 = vmatprep.subr.mxu0 %v162
    %1160 = vmatpush1.msra.mxu0 %v161
    %1161 = vmatprep.subr.mxu0 %v170
    %1162 = vmatpush1.msra.mxu0 %v169
    %1163 = vmatprep.subr.mxu0 %v178
    %1164 = vmatpush1.msra.mxu0 %v177
    %1165 = vmatprep.subr.mxu0 %v186
    %1166 = vmatpush1.msra.mxu0 %v185
    %1167 = vmatprep.subr.mxu0 %v194
    %1168 = vmatpush1.msra.mxu0 %v193
    %1169 = vmatprep.subr.mxu0 %v202
    %1170 = vmatpush1.msra.mxu0 %v201
    %1171 = vmatprep.subr.mxu0 %v210
    %1172 = vmatpush1.msra.mxu0 %v209
    %1173 = vmatprep.subr.mxu0 %v218
    %1174 = vmatpush1.msra.mxu0 %v217
    %1175 = vmatprep.subr.mxu0 %v226
    %1176 = vmatpush1.msra.mxu0 %v225
    %1177 = vmatprep.subr.mxu0 %v234
    %1178 = vmatpush1.msra.mxu0 %v233
    %1179 = vmatprep.subr.mxu0 %v242
    %1180 = vmatpush1.msra.mxu0 %v241
    %1181 = vmatprep.subr.mxu0 %v250
    %1182 = vmatpush1.msra.mxu0 %v249
    %1183 = vmatprep.subr.mxu0 %v258
    %1184 = vmatpush1.msra.mxu0 %v257
    %1185 = vmatprep.subr.mxu0 %v266
    %1186 = vmatpush1.msra.mxu0 %v265
    %1187 = vmatprep.subr.mxu0 0.0
    %1188 = vmatpush1.msra.mxu0 0.0
    %1189 = vmatprep.subr.mxu0 0.0
    %1190 = vmatpush1.msra.mxu0 0.0
    %1191 = vmatprep.subr.mxu0 0.0
    %1192 = vmatpush1.msra.mxu0 0.0
    %1193 = vmatprep.subr.mxu0 0.0
    %1194 = vmatpush1.msra.mxu0 0.0
    %1195 = vmatprep.subr.mxu0 0.0
    %1196 = vmatpush1.msra.mxu0 0.0
    %1197 = vmatprep.subr.mxu0 0.0
    %1198 = vmatpush1.msra.mxu0 0.0
    %1199 = vmatprep.subr.mxu0 0.0
    %1200 = vmatpush1.msra.mxu0 0.0
    %1201 = vmatprep.subr.mxu0 0.0
    %1202 = vmatpush1.msra.mxu0 0.0
    %1203 = vmatprep.subr.mxu0 0.0
    %1204 = vmatpush1.msra.mxu0 0.0
    %1205 = vmatprep.subr.mxu0 0.0
    %1206 = vmatpush1.msra.mxu0 0.0
    %1207 = vmatprep.subr.mxu0 0.0
    %1208 = vmatpush1.msra.mxu0 0.0
    %1209 = vmatprep.subr.mxu0 0.0
    %1210 = vmatpush1.msra.mxu0 0.0
    %1211 = vmatprep.subr.mxu0 0.0
    %1212 = vmatpush1.msra.mxu0 0.0
    %1213 = vmatprep.subr.mxu0 0.0
    %1214 = vmatpush1.msra.mxu0 0.0
    %1215 = vmatprep.subr.mxu0 0.0
    %1216 = vmatpush1.msra.mxu0 0.0
    %1217 = vmatprep.subr.mxu0 0.0
    %1218 = vmatpush1.msra.mxu0 0.0
    %1219 = vmatprep.mubr.f32.mxu0 0.0
    %1220 = vmatmul.mubr.f32.gmra.mrb[0].mxu0 %v1152
    %v1221 = vpop.f32.mrb[0].mxu0
    %v1222 = vadd.f32 %v543, %v1221
    %v1223 = vpop.f32.mrb[0].mxu0
    %v1224 = vadd.f32 %v547, %v1223
    %1225 = vdwg.mxu0
    %1226 = vmatprep.subr.mxu0 %v148
    %1227 = vmatpush1.msra.mxu0 %v147
    %1228 = vmatprep.subr.mxu0 %v156
    %1229 = vmatpush1.msra.mxu0 %v155
    %1230 = vmatprep.subr.mxu0 %v164
    %1231 = vmatpush1.msra.mxu0 %v163
    %1232 = vmatprep.subr.mxu0 %v172
    %1233 = vmatpush1.msra.mxu0 %v171
    %1234 = vmatprep.subr.mxu0 %v180
    %1235 = vmatpush1.msra.mxu0 %v179
    %1236 = vmatprep.subr.mxu0 %v188
    %1237 = vmatpush1.msra.mxu0 %v187
    %1238 = vmatprep.subr.mxu0 %v196
    %1239 = vmatpush1.msra.mxu0 %v195
    %1240 = vmatprep.subr.mxu0 %v204
    %1241 = vmatpush1.msra.mxu0 %v203
    %1242 = vmatprep.subr.mxu0 %v212
    %1243 = vmatpush1.msra.mxu0 %v211
    %1244 = vmatprep.subr.mxu0 %v220
    %1245 = vmatpush1.msra.mxu0 %v219
    %1246 = vmatprep.subr.mxu0 %v228
    %1247 = vmatpush1.msra.mxu0 %v227
    %1248 = vmatprep.subr.mxu0 %v236
    %1249 = vmatpush1.msra.mxu0 %v235
    %1250 = vmatprep.subr.mxu0 %v244
    %1251 = vmatpush1.msra.mxu0 %v243
    %1252 = vmatprep.subr.mxu0 %v252
    %1253 = vmatpush1.msra.mxu0 %v251
    %1254 = vmatprep.subr.mxu0 %v260
    %1255 = vmatpush1.msra.mxu0 %v259
    %1256 = vmatprep.subr.mxu0 %v268
    %1257 = vmatpush1.msra.mxu0 %v267
    %1258 = vmatprep.subr.mxu0 0.0
    %1259 = vmatpush1.msra.mxu0 0.0
    %1260 = vmatprep.subr.mxu0 0.0
    %1261 = vmatpush1.msra.mxu0 0.0
    %1262 = vmatprep.subr.mxu0 0.0
    %1263 = vmatpush1.msra.mxu0 0.0
    %1264 = vmatprep.subr.mxu0 0.0
    %1265 = vmatpush1.msra.mxu0 0.0
    %1266 = vmatprep.subr.mxu0 0.0
    %1267 = vmatpush1.msra.mxu0 0.0
    %1268 = vmatprep.subr.mxu0 0.0
    %1269 = vmatpush1.msra.mxu0 0.0
    %1270 = vmatprep.subr.mxu0 0.0
    %1271 = vmatpush1.msra.mxu0 0.0
    %1272 = vmatprep.subr.mxu0 0.0
    %1273 = vmatpush1.msra.mxu0 0.0
    %1274 = vmatprep.subr.mxu0 0.0
    %1275 = vmatpush1.msra.mxu0 0.0
    %1276 = vmatprep.subr.mxu0 0.0
    %1277 = vmatpush1.msra.mxu0 0.0
    %1278 = vmatprep.subr.mxu0 0.0
    %1279 = vmatpush1.msra.mxu0 0.0
    %1280 = vmatprep.subr.mxu0 0.0
    %1281 = vmatpush1.msra.mxu0 0.0
    %1282 = vmatprep.subr.mxu0 0.0
    %1283 = vmatpush1.msra.mxu0 0.0
    %1284 = vmatprep.subr.mxu0 0.0
    %1285 = vmatpush1.msra.mxu0 0.0
    %1286 = vmatprep.subr.mxu0 0.0
    %1287 = vmatpush1.msra.mxu0 0.0
    %1288 = vmatprep.subr.mxu0 0.0
    %1289 = vmatpush1.msra.mxu0 0.0
    %1290 = vmatprep.mubr.f32.mxu0 0.0
    %1291 = vmatmul.mubr.f32.gmra.mrb[0].mxu0 %v1152
    %v1292 = vpop.f32.mrb[0].mxu0
    %v1293 = vadd.f32 %v551, %v1292
    %v1294 = vpop.f32.mrb[0].mxu0
    %v1295 = vadd.f32 %v555, %v1294
    %1296 = vdwg.mxu0
    %1297 = vmatprep.subr.mxu0 %v150
    %1298 = vmatpush1.msra.mxu0 %v149
    %1299 = vmatprep.subr.mxu0 %v158
    %1300 = vmatpush1.msra.mxu0 %v157
    %1301 = vmatprep.subr.mxu0 %v166
    %1302 = vmatpush1.msra.mxu0 %v165
    %1303 = vmatprep.subr.mxu0 %v174
    %1304 = vmatpush1.msra.mxu0 %v173
    %1305 = vmatprep.subr.mxu0 %v182
    %1306 = vmatpush1.msra.mxu0 %v181
    %1307 = vmatprep.subr.mxu0 %v190
    %1308 = vmatpush1.msra.mxu0 %v189
    %1309 = vmatprep.subr.mxu0 %v198
    %1310 = vmatpush1.msra.mxu0 %v197
    %1311 = vmatprep.subr.mxu0 %v206
    %1312 = vmatpush1.msra.mxu0 %v205
    %1313 = vmatprep.subr.mxu0 %v214
    %1314 = vmatpush1.msra.mxu0 %v213
    %1315 = vmatprep.subr.mxu0 %v222
    %1316 = vmatpush1.msra.mxu0 %v221
    %1317 = vmatprep.subr.mxu0 %v230
    %1318 = vmatpush1.msra.mxu0 %v229
    %1319 = vmatprep.subr.mxu0 %v238
    %1320 = vmatpush1.msra.mxu0 %v237
    %1321 = vmatprep.subr.mxu0 %v246
    %1322 = vmatpush1.msra.mxu0 %v245
    %1323 = vmatprep.subr.mxu0 %v254
    %1324 = vmatpush1.msra.mxu0 %v253
    %1325 = vmatprep.subr.mxu0 %v262
    %1326 = vmatpush1.msra.mxu0 %v261
    %1327 = vmatprep.subr.mxu0 %v270
    %1328 = vmatpush1.msra.mxu0 %v269
    %1329 = vmatprep.subr.mxu0 0.0
    %1330 = vmatpush1.msra.mxu0 0.0
    %1331 = vmatprep.subr.mxu0 0.0
    %1332 = vmatpush1.msra.mxu0 0.0
    %1333 = vmatprep.subr.mxu0 0.0
    %1334 = vmatpush1.msra.mxu0 0.0
    %1335 = vmatprep.subr.mxu0 0.0
    %1336 = vmatpush1.msra.mxu0 0.0
    %1337 = vmatprep.subr.mxu0 0.0
    %1338 = vmatpush1.msra.mxu0 0.0
    %1339 = vmatprep.subr.mxu0 0.0
    %1340 = vmatpush1.msra.mxu0 0.0
    %1341 = vmatprep.subr.mxu0 0.0
    %1342 = vmatpush1.msra.mxu0 0.0
    %1343 = vmatprep.subr.mxu0 0.0
    %1344 = vmatpush1.msra.mxu0 0.0
    %1345 = vmatprep.subr.mxu0 0.0
    %1346 = vmatpush1.msra.mxu0 0.0
    %1347 = vmatprep.subr.mxu0 0.0
    %1348 = vmatpush1.msra.mxu0 0.0
    %1349 = vmatprep.subr.mxu0 0.0
    %1350 = vmatpush1.msra.mxu0 0.0
    %1351 = vmatprep.subr.mxu0 0.0
    %1352 = vmatpush1.msra.mxu0 0.0
    %1353 = vmatprep.subr.mxu0 0.0
    %1354 = vmatpush1.msra.mxu0 0.0
    %1355 = vmatprep.subr.mxu0 0.0
    %1356 = vmatpush1.msra.mxu0 0.0
    %1357 = vmatprep.subr.mxu0 0.0
    %1358 = vmatpush1.msra.mxu0 0.0
    %1359 = vmatprep.subr.mxu0 0.0
    %1360 = vmatpush1.msra.mxu0 0.0
    %1361 = vmatprep.mubr.f32.mxu0 0.0
    %1362 = vmatmul.mubr.f32.gmra.mrb[0].mxu0 %v1152
    %v1363 = vpop.f32.mrb[0].mxu0
    %v1364 = vadd.f32 %v559, %v1363
    %v1365 = vpop.f32.mrb[0].mxu0
    %v1366 = vadd.f32 %v563, %v1365
    %1367 = vdwg.mxu0
    %1368 = vmatprep.subr.mxu0 %v152
    %1369 = vmatpush1.msra.mxu0 %v151
    %1370 = vmatprep.subr.mxu0 %v160
    %1371 = vmatpush1.msra.mxu0 %v159
    %1372 = vmatprep.subr.mxu0 %v168
    %1373 = vmatpush1.msra.mxu0 %v167
    %1374 = vmatprep.subr.mxu0 %v176
    %1375 = vmatpush1.msra.mxu0 %v175
    %1376 = vmatprep.subr.mxu0 %v184
    %1377 = vmatpush1.msra.mxu0 %v183
    %1378 = vmatprep.subr.mxu0 %v192
    %1379 = vmatpush1.msra.mxu0 %v191
    %1380 = vmatprep.subr.mxu0 %v200
    %1381 = vmatpush1.msra.mxu0 %v199
    %1382 = vmatprep.subr.mxu0 %v208
    %1383 = vmatpush1.msra.mxu0 %v207
    %1384 = vmatprep.subr.mxu0 %v216
    %1385 = vmatpush1.msra.mxu0 %v215
    %1386 = vmatprep.subr.mxu0 %v224
    %1387 = vmatpush1.msra.mxu0 %v223
    %1388 = vmatprep.subr.mxu0 %v232
    %1389 = vmatpush1.msra.mxu0 %v231
    %1390 = vmatprep.subr.mxu0 %v240
    %1391 = vmatpush1.msra.mxu0 %v239
    %1392 = vmatprep.subr.mxu0 %v248
    %1393 = vmatpush1.msra.mxu0 %v247
    %1394 = vmatprep.subr.mxu0 %v256
    %1395 = vmatpush1.msra.mxu0 %v255
    %1396 = vmatprep.subr.mxu0 %v264
    %1397 = vmatpush1.msra.mxu0 %v263
    %1398 = vmatprep.subr.mxu0 %v272
    %1399 = vmatpush1.msra.mxu0 %v271
    %1400 = vmatprep.subr.mxu0 0.0
    %1401 = vmatpush1.msra.mxu0 0.0
    %1402 = vmatprep.subr.mxu0 0.0
    %1403 = vmatpush1.msra.mxu0 0.0
    %1404 = vmatprep.subr.mxu0 0.0
    %1405 = vmatpush1.msra.mxu0 0.0
    %1406 = vmatprep.subr.mxu0 0.0
    %1407 = vmatpush1.msra.mxu0 0.0
    %1408 = vmatprep.subr.mxu0 0.0
    %1409 = vmatpush1.msra.mxu0 0.0
    %1410 = vmatprep.subr.mxu0 0.0
    %1411 = vmatpush1.msra.mxu0 0.0
    %1412 = vmatprep.subr.mxu0 0.0
    %1413 = vmatpush1.msra.mxu0 0.0
    %1414 = vmatprep.subr.mxu0 0.0
    %1415 = vmatpush1.msra.mxu0 0.0
    %1416 = vmatprep.subr.mxu0 0.0
    %1417 = vmatpush1.msra.mxu0 0.0
    %1418 = vmatprep.subr.mxu0 0.0
    %1419 = vmatpush1.msra.mxu0 0.0
    %1420 = vmatprep.subr.mxu0 0.0
    %1421 = vmatpush1.msra.mxu0 0.0
    %1422 = vmatprep.subr.mxu0 0.0
    %1423 = vmatpush1.msra.mxu0 0.0
    %1424 = vmatprep.subr.mxu0 0.0
    %1425 = vmatpush1.msra.mxu0 0.0
    %1426 = vmatprep.subr.mxu0 0.0
    %1427 = vmatpush1.msra.mxu0 0.0
    %1428 = vmatprep.subr.mxu0 0.0
    %1429 = vmatpush1.msra.mxu0 0.0
    %1430 = vmatprep.subr.mxu0 0.0
    %1431 = vmatpush1.msra.mxu0 0.0
    %1432 = vmatprep.mubr.f32.mxu0 0.0
    %1433 = vmatmul.mubr.f32.gmra.mrb[0].mxu0 %v1152
    %v1434 = vpop.f32.mrb[0].mxu0
    %v1435 = vadd.f32 %v567, %v1434
    %v1436 = vpop.f32.mrb[0].mxu0
    %v1437 = vadd.f32 %v571, %v1436
    %1438 = vdwg.mxu0
    %v1447 = vcombine.low %v1222, %v1224
    %v1448 = vcombine.low %v1293, %v1295
    %v1449 = vcombine.low %v1364, %v1366
    %v1450 = vcombine.low %v1435, %v1437
    %1455 = vst [vmem:[#allocation14 + $0x20] sm:$0xff] %v1447
    %1456 = vst [vmem:[#allocation14 + $0x28] sm:$0xff] %v1448
    %1457 = vst [vmem:[#allocation14 + $0x30] sm:$0xff] %v1449
    %1458 = vst [vmem:[#allocation14 + $0x38] sm:$0xff] %v1450
    // Predicated region
    $region94: #{tpu_custom_call.1} parent=1 // pred_check
      _
    $region95: #{tpu_custom_call.1} parent=1 // pred_check_branch
      %1460 = sbr.rel (0) target = $region97
    $region96: #{tpu_custom_call.1} parent=1 // pred_region
      %s1462 = ssub.s32 1024, 1024
      %1463 = vsyncadd [#allocation4], %s1462
      %s1465 = sshll.u32 [#allocation14], 4
      %s1466 = int_to_ptr.vmem [resolvable:$true] %s1465
      %1468 = dma.vmem_to_hbm [thread:$0]  %s1466, 1024, %s16, [#allocation4]
    $region97: #{tpu_custom_call.1} parent=1 // pred_fallthru
      _
    // Predicated region
    $region98: #{tpu_custom_call.1} parent=1 // pred_check
      _
    $region99: #{tpu_custom_call.1} parent=1 // pred_check_branch
      %1470 = sbr.rel (0) target = $region101
    $region100: #{tpu_custom_call.1} parent=1 // pred_region
      %1471 = dma.done [#allocation4], 1024
    $region101: #{tpu_custom_call.1} parent=1 // pred_fallthru
      _
    %1472 = vsyncpa [#allocation3], 1
    %1473 = vsyncpa [#allocation6], 1
    %1474 = vsyncpa [#allocation9], 1
    %1475 = vsyncpa [#allocation12], 1
    %1476 = vsyncpa [#allocation4], 1

</llo_original>
